<compile_context>
chip_gen: v7x
topology: tpu7x:2x2x1
jax: 0.10.0
libtpu: 0.0.40
codegen_flags: <defaults>
</compile_context>

<pallas_src>
import functools

import jax
import jax.numpy as jnp
from jax.experimental import pallas as pl
from jax.experimental.pallas import tpu as pltpu


def _round_up(x: int, m: int) -> int:
    return ((x + m - 1) // m) * m


def _make_decoder_kernel(n_hidden: int):
    """Kernel args: (x_ref, w0, b0, ..., w_{H-1}, b_{H-1}, w_out_t, b_out_t, out_ref).

    Hidden layers: bf16 (in, out) weights, f32 (1, out) biases, ReLU.
    Output layer:  bf16 (out_sub, hidden) transposed weight, f32 (out_sub, 1)
    bias, no activation; result written lane-dense as (out_sub, tile).
    f32 accumulation throughout via preferred_element_type.
    """

    def kernel(x_ref, *refs):
        out_ref = refs[-1]
        wb = refs[:-1]
        h = x_ref[...].astype(jnp.bfloat16)                       # (tile, D_in)
        for i in range(n_hidden):
            w = wb[2 * i][...]                                    # (in, hid) bf16
            b = wb[2 * i + 1][...]                                # (1, hid)  f32
            acc = jnp.dot(h, w, preferred_element_type=jnp.float32) + b
            h = jnp.maximum(acc, 0.0).astype(jnp.bfloat16)        # hidden ReLU
        w_out_t = wb[2 * n_hidden][...]                           # (out_sub, hid) bf16
        b_out_t = wb[2 * n_hidden + 1][...]                       # (out_sub, 1)   f32
        # NT matmul: contract hidden dims of (out_sub, hid) and (tile, hid)
        # -> (out_sub, tile), already lane-dense; no XLU transpose needed.
        y_t = jax.lax.dot_general(
            w_out_t, h,
            dimension_numbers=(((1,), (1,)), ((), ())),
            preferred_element_type=jnp.float32) + b_out_t
        out_ref[...] = y_t.astype(out_ref.dtype)

    return kernel


@functools.partial(jax.jit, static_argnames=("nnode_out", "tile_n"))
def decoder_forward(x, weights, biases, *, nnode_out, tile_n=4096):
    """Run the Decoder MLP with a Pallas TPU kernel.

    Args:
      x: (nparticles, nnode_in) float32.
      weights: list of (in_dim, out_dim) f32 arrays (true, un-padded shapes).
      biases: list of (out_dim,) f32 arrays.
      nnode_out: true output dimension (static).
      tile_n: row-tile upper bound, multiple of 128 (static).

    Returns:
      (nparticles, nnode_out) float32.
    """
    assert tile_n % 128 == 0, "tile_n must be a multiple of 128"
    n_linear = len(weights)
    n_hidden = n_linear - 1
    N, D_in = x.shape
    out_sub = _round_up(max(nnode_out, 1), 8)        # sublane-padded output rows

    # Row tile: multiple of 128, large enough to amortize per-step overhead,
    # capped so the grid has >= 2 steps (v7x has 2 TCs sharing the grid).
    tile = min(tile_n, _round_up(pl.cdiv(N, 2), 128))
    grid_steps = pl.cdiv(N, tile)
    grid = (grid_steps,)

    args = []
    in_specs = []
    # x stays f32 in HBM; cast to bf16 inside the kernel after load.
    x_pipeline = pl.Buffered(3) if grid_steps >= 3 else None
    in_specs.append(
        pl.BlockSpec((tile, D_in), lambda i: (i, 0), pipeline_mode=x_pipeline))

    # Hidden layers: standard (in, out) bf16 weights, (1, out) f32 biases.
    for li in range(n_hidden):
        w = weights[li].astype(jnp.bfloat16)
        b = jnp.reshape(biases[li], (1, -1)).astype(jnp.float32)
        args += [w, b]
        in_specs += [pl.BlockSpec(w.shape, lambda i: (0, 0)),
                     pl.BlockSpec(b.shape, lambda i: (0, 0))]

    # Output layer: transposed and sublane-padded to out_sub rows (zero pads).
    w_out_t = jnp.pad(weights[-1].T.astype(jnp.bfloat16),
                      ((0, out_sub - nnode_out), (0, 0)))
    b_out_t = jnp.pad(jnp.reshape(biases[-1], (-1, 1)).astype(jnp.float32),
                      ((0, out_sub - nnode_out), (0, 0)))
    args += [w_out_t, b_out_t]
    in_specs += [pl.BlockSpec(w_out_t.shape, lambda i: (0, 0)),
                 pl.BlockSpec(b_out_t.shape, lambda i: (0, 0))]

    # Transposed, lane-dense output: (out_sub, N), blocks (out_sub, tile).
    out_spec = pl.BlockSpec((out_sub, tile), lambda i: (0, i))

    flops = int(sum(2 * N * w.shape[0] * w.shape[1] for w in weights))
    bytes_accessed = int(
        N * D_in * 4                                   # f32 x read
        + sum(w.size * 2 for w in weights)             # bf16 weights
        + sum(b.size * 4 for b in biases)              # f32 biases
        + out_sub * N * 4)                             # f32 transposed output
    cost = pl.CostEstimate(flops=flops, transcendentals=0,
                           bytes_accessed=bytes_accessed)

    out_t = pl.pallas_call(
        _make_decoder_kernel(n_hidden),
        out_shape=jax.ShapeDtypeStruct((out_sub, N), jnp.float32),
        grid=grid,
        in_specs=in_specs,
        out_specs=out_spec,
        compiler_params=pltpu.CompilerParams(
            dimension_semantics=("parallel",),
            vmem_limit_bytes=48 * 1024 * 1024),
        cost_estimate=cost,
    )(x, *args)

    # (out_sub, N) lane-dense slab -> (N, nnode_out); tiny slice+transpose under jit.
    return out_t[:nnode_out, :].T


def init_decoder_params(key, nnode_in, nnode_out, nmlp_layers, mlp_hidden_dim):
    """PyTorch nn.Linear-style init: U[-1/sqrt(fan_in), +1/sqrt(fan_in)]."""
    sizes = [nnode_in] + [mlp_hidden_dim] * nmlp_layers + [nnode_out]
    weights, biases = [], []
    for i in range(len(sizes) - 1):
        fan_in, fan_out = sizes[i], sizes[i + 1]
        key, kw, kb = jax.random.split(key, 3)
        bound = 1.0 / float(fan_in) ** 0.5
        weights.append(
            jax.random.uniform(kw, (fan_in, fan_out), jnp.float32, -bound, bound))
        biases.append(
            jax.random.uniform(kb, (fan_out,), jnp.float32, -bound, bound))
    return weights, biases


def decoder_reference(x, weights, biases, nnode_out):
    """Pure-JAX reference mirroring the kernel's bf16-operand / f32-accum numerics."""
    h = x.astype(jnp.bfloat16).astype(jnp.float32)
    n = len(weights)
    for i in range(n):
        w = weights[i].astype(jnp.bfloat16).astype(jnp.float32)
        h = jnp.dot(h, w, precision=jax.lax.Precision.HIGHEST) + biases[i].reshape(1, -1)
        if i < n - 1:
            h = jnp.maximum(h, 0.0).astype(jnp.bfloat16).astype(jnp.float32)
    return h[:, :nnode_out]


if __name__ == "__main__":
    # Typical GNS decoder config: latent 128 -> 3D acceleration.
    nnode_in = 128
    nnode_out = 3
    nmlp_layers = 2
    mlp_hidden_dim = 128
    nparticles = 1000   # NOT a multiple of the tile -> exercises the ragged last block

    key = jax.random.PRNGKey(0)
    key, kx = jax.random.split(key)
    x = jax.random.normal(kx, (nparticles, nnode_in), jnp.float32)

    weights, biases = init_decoder_params(
        key, nnode_in, nnode_out, nmlp_layers, mlp_hidden_dim)

    y = decoder_forward(x, weights, biases, nnode_out=nnode_out)
    y = jax.block_until_ready(y)

    y_ref = decoder_reference(x, weights, biases, nnode_out)
    assert y.shape == (nparticles, nnode_out), y.shape
    max_err = float(jnp.max(jnp.abs(y - y_ref)))
    assert jnp.allclose(y, y_ref, atol=5e-3, rtol=1e-2), (
        "mismatch vs reference: max abs err = %e" % max_err)

    print("KERNEL_OK")
</pallas_src>

<mosaic_0001>
module attributes {stable_mosaic.version = 11 : i64} {
  func.func @kernel(%arg0: i32, %arg1: memref<512x128xf32, #tpu.memory_space<vmem>>, %arg2: memref<128x128xbf16, #tpu.memory_space<vmem>>, %arg3: memref<1x128xf32, #tpu.memory_space<vmem>>, %arg4: memref<128x128xbf16, #tpu.memory_space<vmem>>, %arg5: memref<1x128xf32, #tpu.memory_space<vmem>>, %arg6: memref<8x128xbf16, #tpu.memory_space<vmem>>, %arg7: memref<8x1xf32, #tpu.memory_space<vmem>>, %arg8: memref<8x512xf32, #tpu.memory_space<vmem>>) attributes {dimension_semantics = [#tpu.dimension_semantics<parallel>], iteration_bounds = array<i64: 2>, scalar_prefetch = 0 : i64, scratch_operands = 0 : i64, tpu.core_type = #tpu.core_type<tc>, window_params = [{transform_indices = @transform_0, window_bounds = array<i64: 512, 128>}, {pipeline_mode = #tpu.pipeline_mode<synchronous>, transform_indices = @transform_1, window_bounds = array<i64: 128, 128>}, {pipeline_mode = #tpu.pipeline_mode<synchronous>, transform_indices = @transform_2, window_bounds = array<i64: 1, 128>}, {pipeline_mode = #tpu.pipeline_mode<synchronous>, transform_indices = @transform_3, window_bounds = array<i64: 128, 128>}, {pipeline_mode = #tpu.pipeline_mode<synchronous>, transform_indices = @transform_4, window_bounds = array<i64: 1, 128>}, {pipeline_mode = #tpu.pipeline_mode<synchronous>, transform_indices = @transform_5, window_bounds = array<i64: 8, 128>}, {pipeline_mode = #tpu.pipeline_mode<synchronous>, transform_indices = @transform_6, window_bounds = array<i64: 8, 1>}, {transform_indices = @transform_7, window_bounds = array<i64: 8, 512>}]} {
    %c0 = arith.constant 0 : index
    %c0_0 = arith.constant 0 : index
    %0 = vector.load %arg1[%c0, %c0_0] : memref<512x128xf32, #tpu.memory_space<vmem>>, vector<512x128xf32>
    %1 = arith.truncf %0 : vector<512x128xf32> to vector<512x128xbf16>
    %c0_1 = arith.constant 0 : index
    %c0_2 = arith.constant 0 : index
    %2 = vector.load %arg2[%c0_1, %c0_2] : memref<128x128xbf16, #tpu.memory_space<vmem>>, vector<128x128xbf16>
    %c0_3 = arith.constant 0 : index
    %c0_4 = arith.constant 0 : index
    %3 = vector.load %arg3[%c0_3, %c0_4] : memref<1x128xf32, #tpu.memory_space<vmem>>, vector<1x128xf32>
    %cst = arith.constant dense<0.000000e+00> : vector<512x128xf32>
    %4 = tpu.matmul %1, %2, %cst {dimension_numbers = #tpu.dot_dimension_numbers<[1], [0], [0], [1], [0, 0, 1, 1], [], []>} : vector<512x128xbf16>, vector<128x128xbf16>, vector<512x128xf32> -> vector<512x128xf32>
    %5 = vector.broadcast %3 : vector<1x128xf32> to vector<512x128xf32>
    %6 = arith.addf %4, %5 : vector<512x128xf32>
    %cst_5 = arith.constant 0.000000e+00 : f32
    %7 = vector.broadcast %cst_5 : f32 to vector<512x128xf32>
    %8 = arith.maximumf %6, %7 : vector<512x128xf32>
    %9 = arith.truncf %8 : vector<512x128xf32> to vector<512x128xbf16>
    %c0_6 = arith.constant 0 : index
    %c0_7 = arith.constant 0 : index
    %10 = vector.load %arg4[%c0_6, %c0_7] : memref<128x128xbf16, #tpu.memory_space<vmem>>, vector<128x128xbf16>
    %c0_8 = arith.constant 0 : index
    %c0_9 = arith.constant 0 : index
    %11 = vector.load %arg5[%c0_8, %c0_9] : memref<1x128xf32, #tpu.memory_space<vmem>>, vector<1x128xf32>
    %cst_10 = arith.constant dense<0.000000e+00> : vector<512x128xf32>
    %12 = tpu.matmul %9, %10, %cst_10 {dimension_numbers = #tpu.dot_dimension_numbers<[1], [0], [0], [1], [0, 0, 1, 1], [], []>} : vector<512x128xbf16>, vector<128x128xbf16>, vector<512x128xf32> -> vector<512x128xf32>
    %13 = vector.broadcast %11 : vector<1x128xf32> to vector<512x128xf32>
    %14 = arith.addf %12, %13 : vector<512x128xf32>
    %cst_11 = arith.constant 0.000000e+00 : f32
    %15 = vector.broadcast %cst_11 : f32 to vector<512x128xf32>
    %16 = arith.maximumf %14, %15 : vector<512x128xf32>
    %17 = arith.truncf %16 : vector<512x128xf32> to vector<512x128xbf16>
    %c0_12 = arith.constant 0 : index
    %c0_13 = arith.constant 0 : index
    %18 = vector.load %arg6[%c0_12, %c0_13] : memref<8x128xbf16, #tpu.memory_space<vmem>>, vector<8x128xbf16>
    %c0_14 = arith.constant 0 : index
    %c0_15 = arith.constant 0 : index
    %19 = vector.load %arg7[%c0_14, %c0_15] : memref<8x1xf32, #tpu.memory_space<vmem>>, vector<8x1xf32>
    %cst_16 = arith.constant dense<0.000000e+00> : vector<8x512xf32>
    %20 = tpu.matmul %18, %17, %cst_16 {dimension_numbers = #tpu.dot_dimension_numbers<[1], [1], [0], [0], [0, 0, 1, 0], [], []>} : vector<8x128xbf16>, vector<512x128xbf16>, vector<8x512xf32> -> vector<8x512xf32>
    %21 = vector.broadcast %19 : vector<8x1xf32> to vector<8x512xf32>
    %22 = arith.addf %20, %21 : vector<8x512xf32>
    %c0_17 = arith.constant 0 : index
    %c0_18 = arith.constant 0 : index
    %23 = vector.load %arg8[%c0_17, %c0_18] : memref<8x512xf32, #tpu.memory_space<vmem>>, vector<8x512xf32>
    tpu.vector_store %arg8[%c0_17, %c0_18], %22 {strides = array<i32>} : memref<8x512xf32, #tpu.memory_space<vmem>>, vector<8x512xf32>,
    return
  }
  func.func @transform_0(%arg0: i32) -> (i32, i32) {
    %c0_i32 = arith.constant 0 : i32
    %c0_i32_0 = arith.constant 0 : i32
    return %arg0, %c0_i32 : i32, i32
  }
  func.func @transform_1(%arg0: i32) -> (i32, i32) {
    %c0_i32 = arith.constant 0 : i32
    %c0_i32_0 = arith.constant 0 : i32
    %c0_i32_1 = arith.constant 0 : i32
    return %c0_i32, %c0_i32_0 : i32, i32
  }
  func.func @transform_2(%arg0: i32) -> (i32, i32) {
    %c0_i32 = arith.constant 0 : i32
    %c0_i32_0 = arith.constant 0 : i32
    %c0_i32_1 = arith.constant 0 : i32
    return %c0_i32, %c0_i32_0 : i32, i32
  }
  func.func @transform_3(%arg0: i32) -> (i32, i32) {
    %c0_i32 = arith.constant 0 : i32
    %c0_i32_0 = arith.constant 0 : i32
    %c0_i32_1 = arith.constant 0 : i32
    return %c0_i32, %c0_i32_0 : i32, i32
  }
  func.func @transform_4(%arg0: i32) -> (i32, i32) {
    %c0_i32 = arith.constant 0 : i32
    %c0_i32_0 = arith.constant 0 : i32
    %c0_i32_1 = arith.constant 0 : i32
    return %c0_i32, %c0_i32_0 : i32, i32
  }
  func.func @transform_5(%arg0: i32) -> (i32, i32) {
    %c0_i32 = arith.constant 0 : i32
    %c0_i32_0 = arith.constant 0 : i32
    %c0_i32_1 = arith.constant 0 : i32
    return %c0_i32, %c0_i32_0 : i32, i32
  }
  func.func @transform_6(%arg0: i32) -> (i32, i32) {
    %c0_i32 = arith.constant 0 : i32
    %c0_i32_0 = arith.constant 0 : i32
    %c0_i32_1 = arith.constant 0 : i32
    return %c0_i32, %c0_i32_0 : i32, i32
  }
  func.func @transform_7(%arg0: i32) -> (i32, i32) {
    %c0_i32 = arith.constant 0 : i32
    %c0_i32_0 = arith.constant 0 : i32
    return %c0_i32, %arg0 : i32, i32
  }
}

</mosaic_0001>

<llo_original>
// kernel: decoder_forward.1
$region0: #{decoder_forward.1}
  #allocation0 [shape = 'u32[]', space=smem, size = 0x4, offset = 0x4, fixed_abs, tag = 'smem constant byte address 0x4 - core index']
  #allocation1 [shape = 'u32[144,128]{1,0:T(1,128)}', space=vmem, size = 0x12000, scoped, tag = 'internal scratch']
  %s0 = inlined_call_operand.hbm [shape: f32[1000,128], index: 0, kind: input, shape index: {}]
  %s1 = inlined_call_operand.vmem [shape: bf16[128,128], index: 1, kind: input, shape index: {}]
  %s2 = inlined_call_operand.vmem [shape: f32[1,128], index: 2, kind: input, shape index: {}]
  %s3 = inlined_call_operand.vmem [shape: bf16[128,128], index: 3, kind: input, shape index: {}]
  %s4 = inlined_call_operand.vmem [shape: f32[1,128], index: 4, kind: input, shape index: {}]
  %s5 = inlined_call_operand.vmem [shape: bf16[8,128], index: 5, kind: input, shape index: {}]
  %s6 = inlined_call_operand.vmem [shape: f32[8,1], index: 6, kind: input, shape index: {}]
  %s7 = inlined_call_operand.vmem [shape: f32[8,1000], index: 7, kind: output, shape index: {}]
  %s8 = sld [smem:[#allocation0]]
  $region65: #{decoder_forward.1} parent=0
    _
  %s10 = ssub.s32 1, %s8
  %s11 = scalar_select 0, %s10, %s8
  $region1: #{decoder_forward.1} parent=0
    #allocation2 [shape = 'u8[524288]{0}', space=vmem, size = 0x80000, scoped, tag = 'input window, operand 0']
    #allocation3 [shape = 's32[2]{0}', space=sflag, size = 0x8, scoped, tag = 'scoped memory for decoder_forward.1']
    %12 = vsyncpa [#allocation3], 0
    %s13 = scalar_lea.sflag [#allocation3], 1
    %14 = vsyncpa %s13, 0
    loop: start=0, step=1, limit=4
    $region2: #{decoder_forward.1} parent=1 // loop_pre_header
      _
    $region3: #{decoder_forward.1} parent=1 // loop_header
      %s16 = sphi 0, %s20
      %p17 = scmp.ge.s32.totalorder %s16, 4
      %s26 = sphi 0, %s28
      %s29 = sphi 0, %s26
      %s30 = sphi 0, %s29
      %s46 = sphi 0, %s30
      %s50 = sphi 0, %s50
      %s52 = sphi 0, %s50
      %s53 = sphi 0, %s52
      %s67 = sphi 0, %s53
      %s71 = sphi 0, %s71
      %s73 = sphi 0, %s71
      %s74 = sphi 0, %s73
      %s88 = sphi 0, %s74
      %s92 = sphi 0, %s92
      %s94 = sphi 0, %s92
      %s95 = sphi 0, %s94
      %s109 = sphi 0, %s95
      %s113 = sphi 0, %s113
      %s115 = sphi 0, %s113
      %s116 = sphi 0, %s115
      %s130 = sphi 0, %s116
      %s134 = sphi 0, %s134
      %s136 = sphi 0, %s134
      %s137 = sphi 0, %s136
      %s151 = sphi 0, %s137
      %s155 = sphi 0, %s155
      %s157 = sphi 0, %s155
      %s158 = sphi 0, %s157
      %s172 = sphi 0, %s158
      %s178 = sphi 0, %s180
      %s181 = sphi 0, %s178
      %s182 = sphi 0, %s181
      %s198 = sphi 0, %s182
    $region4: #{decoder_forward.1} parent=1 // loop_header_branch
      %19 = sbr.rel (%p17) target = $region8
    $region5: #{decoder_forward.1} parent=1 // loop_body
      %s21 = ssub.s32 %s16, 1
      %s22 = ssub.s32 %s16, 2
      %s23 = sadd.s32 %s16, 1
      %s24 = ssub.s32 %s16, %s23
      %p25 = scmp.eq.s32.totalorder %s24, 0
      %s27 = sadd.s32 %s26, 1
      %s28 = scalar_select %p25, %s26, %s27
      %p31 = pneg %p25
      %p32 = scmp.eq.s32.totalorder %s16, 1
      %p33 = por %p31, %p32
      %p34 = scmp.ne.s32.totalorder %s26, %s29
      %p35 = scmp.eq.s32.totalorder %s16, 0
      %p36 = por %p34, %p35
      %p37 = scmp.ne.s32.totalorder %s26, %s29
      %p38 = scmp.eq.s32.totalorder %s21, 1
      %p39 = por %p37, %p38
      %p40 = scmp.ne.s32.totalorder %s29, %s30
      %p41 = scmp.eq.s32.totalorder %s21, 0
      %p42 = por %p40, %p41
      %p43 = scmp.ne.s32.totalorder %s29, %s30
      %p44 = scmp.eq.s32.totalorder %s22, 1
      %p45 = por %p43, %p44
      %p47 = scmp.ne.s32.totalorder %s30, %s46
      %p48 = scmp.eq.s32.totalorder %s22, 0
      %p49 = por %p47, %p48
      %s51 = sadd.s32 %s50, 1
      %p54 = scmp.eq.s32.totalorder %s16, 1
      %p55 = scmp.ne.s32.totalorder %s50, %s52
      %p56 = scmp.eq.s32.totalorder %s16, 0
      %p57 = por %p55, %p56
      %p58 = scmp.ne.s32.totalorder %s50, %s52
      %p59 = scmp.eq.s32.totalorder %s21, 1
      %p60 = por %p58, %p59
      %p61 = scmp.ne.s32.totalorder %s52, %s53
      %p62 = scmp.eq.s32.totalorder %s21, 0
      %p63 = por %p61, %p62
      %p64 = scmp.ne.s32.totalorder %s52, %s53
      %p65 = scmp.eq.s32.totalorder %s22, 1
      %p66 = por %p64, %p65
      %p68 = scmp.ne.s32.totalorder %s53, %s67
      %p69 = scmp.eq.s32.totalorder %s22, 0
      %p70 = por %p68, %p69
      %s72 = sadd.s32 %s71, 1
      %p75 = scmp.eq.s32.totalorder %s16, 1
      %p76 = scmp.ne.s32.totalorder %s71, %s73
      %p77 = scmp.eq.s32.totalorder %s16, 0
      %p78 = por %p76, %p77
      %p79 = scmp.ne.s32.totalorder %s71, %s73
      %p80 = scmp.eq.s32.totalorder %s21, 1
      %p81 = por %p79, %p80
      %p82 = scmp.ne.s32.totalorder %s73, %s74
      %p83 = scmp.eq.s32.totalorder %s21, 0
      %p84 = por %p82, %p83
      %p85 = scmp.ne.s32.totalorder %s73, %s74
      %p86 = scmp.eq.s32.totalorder %s22, 1
      %p87 = por %p85, %p86
      %p89 = scmp.ne.s32.totalorder %s74, %s88
      %p90 = scmp.eq.s32.totalorder %s22, 0
      %p91 = por %p89, %p90
      %s93 = sadd.s32 %s92, 1
      %p96 = scmp.eq.s32.totalorder %s16, 1
      %p97 = scmp.ne.s32.totalorder %s92, %s94
      %p98 = scmp.eq.s32.totalorder %s16, 0
      %p99 = por %p97, %p98
      %p100 = scmp.ne.s32.totalorder %s92, %s94
      %p101 = scmp.eq.s32.totalorder %s21, 1
      %p102 = por %p100, %p101
      %p103 = scmp.ne.s32.totalorder %s94, %s95
      %p104 = scmp.eq.s32.totalorder %s21, 0
      %p105 = por %p103, %p104
      %p106 = scmp.ne.s32.totalorder %s94, %s95
      %p107 = scmp.eq.s32.totalorder %s22, 1
      %p108 = por %p106, %p107
      %p110 = scmp.ne.s32.totalorder %s95, %s109
      %p111 = scmp.eq.s32.totalorder %s22, 0
      %p112 = por %p110, %p111
      %s114 = sadd.s32 %s113, 1
      %p117 = scmp.eq.s32.totalorder %s16, 1
      %p118 = scmp.ne.s32.totalorder %s113, %s115
      %p119 = scmp.eq.s32.totalorder %s16, 0
      %p120 = por %p118, %p119
      %p121 = scmp.ne.s32.totalorder %s113, %s115
      %p122 = scmp.eq.s32.totalorder %s21, 1
      %p123 = por %p121, %p122
      %p124 = scmp.ne.s32.totalorder %s115, %s116
      %p125 = scmp.eq.s32.totalorder %s21, 0
      %p126 = por %p124, %p125
      %p127 = scmp.ne.s32.totalorder %s115, %s116
      %p128 = scmp.eq.s32.totalorder %s22, 1
      %p129 = por %p127, %p128
      %p131 = scmp.ne.s32.totalorder %s116, %s130
      %p132 = scmp.eq.s32.totalorder %s22, 0
      %p133 = por %p131, %p132
      %s135 = sadd.s32 %s134, 1
      %p138 = scmp.eq.s32.totalorder %s16, 1
      %p139 = scmp.ne.s32.totalorder %s134, %s136
      %p140 = scmp.eq.s32.totalorder %s16, 0
      %p141 = por %p139, %p140
      %p142 = scmp.ne.s32.totalorder %s134, %s136
      %p143 = scmp.eq.s32.totalorder %s21, 1
      %p144 = por %p142, %p143
      %p145 = scmp.ne.s32.totalorder %s136, %s137
      %p146 = scmp.eq.s32.totalorder %s21, 0
      %p147 = por %p145, %p146
      %p148 = scmp.ne.s32.totalorder %s136, %s137
      %p149 = scmp.eq.s32.totalorder %s22, 1
      %p150 = por %p148, %p149
      %p152 = scmp.ne.s32.totalorder %s137, %s151
      %p153 = scmp.eq.s32.totalorder %s22, 0
      %p154 = por %p152, %p153
      %s156 = sadd.s32 %s155, 1
      %p159 = scmp.eq.s32.totalorder %s16, 1
      %p160 = scmp.ne.s32.totalorder %s155, %s157
      %p161 = scmp.eq.s32.totalorder %s16, 0
      %p162 = por %p160, %p161
      %p163 = scmp.ne.s32.totalorder %s155, %s157
      %p164 = scmp.eq.s32.totalorder %s21, 1
      %p165 = por %p163, %p164
      %p166 = scmp.ne.s32.totalorder %s157, %s158
      %p167 = scmp.eq.s32.totalorder %s21, 0
      %p168 = por %p166, %p167
      %p169 = scmp.ne.s32.totalorder %s157, %s158
      %p170 = scmp.eq.s32.totalorder %s22, 1
      %p171 = por %p169, %p170
      %p173 = scmp.ne.s32.totalorder %s158, %s172
      %p174 = scmp.eq.s32.totalorder %s22, 0
      %p175 = por %p173, %p174
      %s176 = ssub.s32 %s16, %s23
      %p177 = scmp.eq.s32.totalorder %s176, 0
      %s179 = sadd.s32 %s178, 1
      %s180 = scalar_select %p177, %s178, %s179
      %p183 = pneg %p177
      %p184 = scmp.eq.s32.totalorder %s16, 1
      %p185 = por %p183, %p184
      %p186 = scmp.ne.s32.totalorder %s178, %s181
      %p187 = scmp.eq.s32.totalorder %s16, 0
      %p188 = por %p186, %p187
      %p189 = scmp.ne.s32.totalorder %s178, %s181
      %p190 = scmp.eq.s32.totalorder %s21, 1
      %p191 = por %p189, %p190
      %p192 = scmp.ne.s32.totalorder %s181, %s182
      %p193 = scmp.eq.s32.totalorder %s21, 0
      %p194 = por %p192, %p193
      %p195 = scmp.ne.s32.totalorder %s181, %s182
      %p196 = scmp.eq.s32.totalorder %s22, 1
      %p197 = por %p195, %p196
      %p199 = scmp.ne.s32.totalorder %s182, %s198
      %p200 = scmp.eq.s32.totalorder %s22, 0
      %p201 = por %p199, %p200
      %p202 = scmp.le.s32.totalorder 1, %s16
      %p203 = scmp.lt.s32.totalorder %s16, 3
      %p204 = pnand %p202, %p203
      %p205 = pneg %p204
      // Predicated region
      $region9: #{decoder_forward.1} parent=5 // pred_check
        _
      $region10: #{decoder_forward.1} parent=5 // pred_check_branch
        %207 = sbr.rel (%p204) target = $region12
      $region11: #{decoder_forward.1} parent=5 // pred_region
        %s208 = ssub.s32 %s16, 1
        // Predicated region
        $region13: #{decoder_forward.1} parent=11 // pred_check
          %p209 = pneg %p63
        $region14: #{decoder_forward.1} parent=11 // pred_check_branch
          %211 = sbr.rel (%p209) target = $region16
        $region15: #{decoder_forward.1} parent=11 // pred_region
          _
        $region16: #{decoder_forward.1} parent=11 // pred_fallthru
          _
        // Predicated region
        $region17: #{decoder_forward.1} parent=11 // pred_check
          %p212 = pneg %p84
        $region18: #{decoder_forward.1} parent=11 // pred_check_branch
          %214 = sbr.rel (%p212) target = $region20
        $region19: #{decoder_forward.1} parent=11 // pred_region
          _
        $region20: #{decoder_forward.1} parent=11 // pred_fallthru
          _
        // Predicated region
        $region21: #{decoder_forward.1} parent=11 // pred_check
          %p215 = pneg %p105
        $region22: #{decoder_forward.1} parent=11 // pred_check_branch
          %217 = sbr.rel (%p215) target = $region24
        $region23: #{decoder_forward.1} parent=11 // pred_region
          _
        $region24: #{decoder_forward.1} parent=11 // pred_fallthru
          _
        // Predicated region
        $region25: #{decoder_forward.1} parent=11 // pred_check
          %p218 = pneg %p126
        $region26: #{decoder_forward.1} parent=11 // pred_check_branch
          %220 = sbr.rel (%p218) target = $region28
        $region27: #{decoder_forward.1} parent=11 // pred_region
          _
        $region28: #{decoder_forward.1} parent=11 // pred_fallthru
          _
        // Predicated region
        $region29: #{decoder_forward.1} parent=11 // pred_check
          %p221 = pneg %p147
        $region30: #{decoder_forward.1} parent=11 // pred_check_branch
          %223 = sbr.rel (%p221) target = $region32
        $region31: #{decoder_forward.1} parent=11 // pred_region
          _
        $region32: #{decoder_forward.1} parent=11 // pred_fallthru
          _
        // Predicated region
        $region33: #{decoder_forward.1} parent=11 // pred_check
          %p224 = pneg %p168
        $region34: #{decoder_forward.1} parent=11 // pred_check_branch
          %226 = sbr.rel (%p224) target = $region36
        $region35: #{decoder_forward.1} parent=11 // pred_region
          _
        $region36: #{decoder_forward.1} parent=11 // pred_fallthru
          _
      $region12: #{decoder_forward.1} parent=5 // pred_fallthru
        _
      %p227 = scmp.lt.s32.totalorder %s16, 2
      // Predicated region
      $region37: #{decoder_forward.1} parent=5 // pred_check
        %p228 = pneg %p227
      $region38: #{decoder_forward.1} parent=5 // pred_check_branch
        %230 = sbr.rel (%p228) target = $region40
      $region39: #{decoder_forward.1} parent=5 // pred_region
        // Predicated region
        $region41: #{decoder_forward.1} parent=39 // pred_check
          %p231 = pneg %p36
        $region42: #{decoder_forward.1} parent=39 // pred_check_branch
          %233 = sbr.rel (%p231) target = $region44
        $region43: #{decoder_forward.1} parent=39 // pred_region
          %s234 = sand.u32 %s26, 1
          %s235 = scalar_lea.sflag [#allocation3], %s234
          %s236 = sand.u32 %s26, 1
          %s237 = smul.addr %s236, 512
          %s238 = scalar_lea.vmem [#allocation2], %s237
          %s239 = smul.u32 64, %s16
          %s240 = ssub.s32 125, %s239
          %p241 = scmp.lt.s32.totalorder %s240, 64
          %s242 = scalar_select %p241, %s240, 64
          %s243 = smul.u32 128, %s242
          %s245 = ssub.s32 8192, %s243
          %246 = vsyncadd %s235, %s245
          %p247 = scmp.ne.s32.totalorder 0, %s243
          %s248 = smul.addr %s239, 128
          %s249 = scalar_lea.hbm %s0, %s248
          %s250 = smul.u32 8, %s242
          %s251 = sshll.u32 %s238, 4
          %s252 = int_to_ptr.vmem [resolvable:$true] %s251
          %s253 = sshll.u32 %s250, 4
          %257 = dma.hbm_to_vmem [thread:$0]  (%p247), %s249, %s253, %s252, %s235, 128, 128, 8
        $region44: #{decoder_forward.1} parent=39 // pred_fallthru
          _
      $region40: #{decoder_forward.1} parent=5 // pred_fallthru
        _
      %p258 = scmp.le.s32.totalorder 1, %s16
      %p259 = scmp.lt.s32.totalorder %s16, 3
      %p260 = pnand %p258, %p259
      %p261 = pneg %p260
      // Predicated region
      $region45: #{decoder_forward.1} parent=5 // pred_check
        _
      $region46: #{decoder_forward.1} parent=5 // pred_check_branch
        %263 = sbr.rel (%p260) target = $region48
      $region47: #{decoder_forward.1} parent=5 // pred_region
        %s264 = ssub.s32 %s16, 1
        %s265 = sand.u32 %s29, 1
        %s266 = scalar_lea.sflag [#allocation3], %s265
        %s267 = sand.u32 %s29, 1
        %s268 = smul.addr %s267, 512
        %s269 = scalar_lea.vmem [#allocation2], %s268
        // Predicated region
        $region49: #{decoder_forward.1} parent=47 // pred_check
          %p270 = pneg %p42
        $region50: #{decoder_forward.1} parent=47 // pred_check_branch
          %272 = sbr.rel (%p270) target = $region52
        $region51: #{decoder_forward.1} parent=47 // pred_region
          %273 = dma.done %s266, 8192
        $region52: #{decoder_forward.1} parent=47 // pred_fallthru
          _
        %s274 = sand.u32 %s29, 1
        %s275 = scalar_lea.sflag [#allocation3], %s274
        %s276 = sand.u32 %s29, 1
        %s277 = smul.addr %s276, 512
        %s278 = scalar_lea.vmem [#allocation2], %s277
        %p279 = pneg %p42
        %p280 = pneg %p39
        %p281 = pneg %p63
        %p282 = pneg %p60
        %p283 = pneg %p84
        %p284 = pneg %p81
        %p285 = pneg %p105
        %p286 = pneg %p102
        %p287 = pneg %p126
        %p288 = pneg %p123
        %p289 = pneg %p147
        %p290 = pneg %p144
        %p291 = pneg %p168
        %p292 = pneg %p165
        %p293 = pneg %p194
        %p294 = pneg %p191
        %s295 = smul.u32 4, %s21
        %p296 = scmp.lt.s32.totalorder %s295, 7
        %s297 = scalar_select %p296, %s295, 7
        %s298 = smul.addr %s297, 8
        %s299 = scalar_lea.vmem %s7, %s298
        %s300 = smul.u32 64, %s21
        %s301 = ssub.s32 125, %s300
        %p302 = scmp.lt.s32.totalorder %s301, 64
        %s303 = scalar_select %p302, %s301, 64
        %s304 = smul.u32 128, %s303
        %s305 = smul.u32 4, %s21
        %p306 = scmp.lt.s32.totalorder %s305, 7
        %s307 = scalar_select %p306, %s305, 7
        %s308 = smul.addr %s307, 8
        %s309 = scalar_lea.vmem %s7, %s308
        %s310 = smul.u32 4, %s21
        %v312 = vld [vmem:[%s269] sm:$0xff]
        %v313 = vld [vmem:[%s269 + $0x8] sm:$0xff]
        %v314 = vld [vmem:[%s269 + $0x10] sm:$0xff]
        %v315 = vld [vmem:[%s269 + $0x18] sm:$0xff]
        %v316 = vld [vmem:[%s269 + $0x20] sm:$0xff]
        %v317 = vld [vmem:[%s269 + $0x28] sm:$0xff]
        %v318 = vld [vmem:[%s269 + $0x30] sm:$0xff]
        %v319 = vld [vmem:[%s269 + $0x38] sm:$0xff]
        %v320 = vld [vmem:[%s269 + $0x40] sm:$0xff]
        %v321 = vld [vmem:[%s269 + $0x48] sm:$0xff]
        %v322 = vld [vmem:[%s269 + $0x50] sm:$0xff]
        %v323 = vld [vmem:[%s269 + $0x58] sm:$0xff]
        %v324 = vld [vmem:[%s269 + $0x60] sm:$0xff]
        %v325 = vld [vmem:[%s269 + $0x68] sm:$0xff]
        %v326 = vld [vmem:[%s269 + $0x70] sm:$0xff]
        %v327 = vld [vmem:[%s269 + $0x78] sm:$0xff]
        %v328 = vld [vmem:[%s269 + $0x80] sm:$0xff]
        %v329 = vld [vmem:[%s269 + $0x88] sm:$0xff]
        %v330 = vld [vmem:[%s269 + $0x90] sm:$0xff]
        %v331 = vld [vmem:[%s269 + $0x98] sm:$0xff]
        %v332 = vld [vmem:[%s269 + $0xa0] sm:$0xff]
        %v333 = vld [vmem:[%s269 + $0xa8] sm:$0xff]
        %v334 = vld [vmem:[%s269 + $0xb0] sm:$0xff]
        %v335 = vld [vmem:[%s269 + $0xb8] sm:$0xff]
        %v336 = vld [vmem:[%s269 + $0xc0] sm:$0xff]
        %v337 = vld [vmem:[%s269 + $0xc8] sm:$0xff]
        %v338 = vld [vmem:[%s269 + $0xd0] sm:$0xff]
        %v339 = vld [vmem:[%s269 + $0xd8] sm:$0xff]
        %v340 = vld [vmem:[%s269 + $0xe0] sm:$0xff]
        %v341 = vld [vmem:[%s269 + $0xe8] sm:$0xff]
        %v342 = vld [vmem:[%s269 + $0xf0] sm:$0xff]
        %v343 = vld [vmem:[%s269 + $0xf8] sm:$0xff]
        %v344 = vld [vmem:[%s269 + $0x100] sm:$0xff]
        %v345 = vld [vmem:[%s269 + $0x108] sm:$0xff]
        %v346 = vld [vmem:[%s269 + $0x110] sm:$0xff]
        %v347 = vld [vmem:[%s269 + $0x118] sm:$0xff]
        %v348 = vld [vmem:[%s269 + $0x120] sm:$0xff]
        %v349 = vld [vmem:[%s269 + $0x128] sm:$0xff]
        %v350 = vld [vmem:[%s269 + $0x130] sm:$0xff]
        %v351 = vld [vmem:[%s269 + $0x138] sm:$0xff]
        %v352 = vld [vmem:[%s269 + $0x140] sm:$0xff]
        %v353 = vld [vmem:[%s269 + $0x148] sm:$0xff]
        %v354 = vld [vmem:[%s269 + $0x150] sm:$0xff]
        %v355 = vld [vmem:[%s269 + $0x158] sm:$0xff]
        %v356 = vld [vmem:[%s269 + $0x160] sm:$0xff]
        %v357 = vld [vmem:[%s269 + $0x168] sm:$0xff]
        %v358 = vld [vmem:[%s269 + $0x170] sm:$0xff]
        %v359 = vld [vmem:[%s269 + $0x178] sm:$0xff]
        %v360 = vld [vmem:[%s269 + $0x180] sm:$0xff]
        %v361 = vld [vmem:[%s269 + $0x188] sm:$0xff]
        %v362 = vld [vmem:[%s269 + $0x190] sm:$0xff]
        %v363 = vld [vmem:[%s269 + $0x198] sm:$0xff]
        %v364 = vld [vmem:[%s269 + $0x1a0] sm:$0xff]
        %v365 = vld [vmem:[%s269 + $0x1a8] sm:$0xff]
        %v366 = vld [vmem:[%s269 + $0x1b0] sm:$0xff]
        %v367 = vld [vmem:[%s269 + $0x1b8] sm:$0xff]
        %v368 = vld [vmem:[%s269 + $0x1c0] sm:$0xff]
        %v369 = vld [vmem:[%s269 + $0x1c8] sm:$0xff]
        %v370 = vld [vmem:[%s269 + $0x1d0] sm:$0xff]
        %v371 = vld [vmem:[%s269 + $0x1d8] sm:$0xff]
        %v372 = vld [vmem:[%s269 + $0x1e0] sm:$0xff]
        %v373 = vld [vmem:[%s269 + $0x1e8] sm:$0xff]
        %v374 = vld [vmem:[%s269 + $0x1f0] sm:$0xff]
        %v375 = vld [vmem:[%s269 + $0x1f8] sm:$0xff]
        %v376 = vpack.c.bf16 %v313, %v312
        %v377 = vpack.c.bf16 %v315, %v314
        %v378 = vpack.c.bf16 %v317, %v316
        %v379 = vpack.c.bf16 %v319, %v318
        %v380 = vpack.c.bf16 %v321, %v320
        %v381 = vpack.c.bf16 %v323, %v322
        %v382 = vpack.c.bf16 %v325, %v324
        %v383 = vpack.c.bf16 %v327, %v326
        %v384 = vpack.c.bf16 %v329, %v328
        %v385 = vpack.c.bf16 %v331, %v330
        %v386 = vpack.c.bf16 %v333, %v332
        %v387 = vpack.c.bf16 %v335, %v334
        %v388 = vpack.c.bf16 %v337, %v336
        %v389 = vpack.c.bf16 %v339, %v338
        %v390 = vpack.c.bf16 %v341, %v340
        %v391 = vpack.c.bf16 %v343, %v342
        %v392 = vpack.c.bf16 %v345, %v344
        %v393 = vpack.c.bf16 %v347, %v346
        %v394 = vpack.c.bf16 %v349, %v348
        %v395 = vpack.c.bf16 %v351, %v350
        %v396 = vpack.c.bf16 %v353, %v352
        %v397 = vpack.c.bf16 %v355, %v354
        %v398 = vpack.c.bf16 %v357, %v356
        %v399 = vpack.c.bf16 %v359, %v358
        %v400 = vpack.c.bf16 %v361, %v360
        %v401 = vpack.c.bf16 %v363, %v362
        %v402 = vpack.c.bf16 %v365, %v364
        %v403 = vpack.c.bf16 %v367, %v366
        %v404 = vpack.c.bf16 %v369, %v368
        %v405 = vpack.c.bf16 %v371, %v370
        %v406 = vpack.c.bf16 %v373, %v372
        %v407 = vpack.c.bf16 %v375, %v374
        %v408 = vld [vmem:[%s1] sm:$0xf]
        %v409 = vld [vmem:[%s1 + $0x4] sm:$0xf]
        %v410 = vld [vmem:[%s1 + $0x8] sm:$0xf]
        %v411 = vld [vmem:[%s1 + $0xc] sm:$0xf]
        %v412 = vld [vmem:[%s1 + $0x10] sm:$0xf]
        %v413 = vld [vmem:[%s1 + $0x14] sm:$0xf]
        %v414 = vld [vmem:[%s1 + $0x18] sm:$0xf]
        %v415 = vld [vmem:[%s1 + $0x1c] sm:$0xf]
        %v416 = vld [vmem:[%s1 + $0x20] sm:$0xf]
        %v417 = vld [vmem:[%s1 + $0x24] sm:$0xf]
        %v418 = vld [vmem:[%s1 + $0x28] sm:$0xf]
        %v419 = vld [vmem:[%s1 + $0x2c] sm:$0xf]
        %v420 = vld [vmem:[%s1 + $0x30] sm:$0xf]
        %v421 = vld [vmem:[%s1 + $0x34] sm:$0xf]
        %v422 = vld [vmem:[%s1 + $0x38] sm:$0xf]
        %v423 = vld [vmem:[%s1 + $0x3c] sm:$0xf]
        %v424 = vld [vmem:[%s2] sm:$0x1]
        %v426 = vlaneseq
        %v427 = vshrl.u32 %v426, 7
        %v428 = vsub.s32 0, %v427
        %v429 = vrot.slane %v424, %v428
        %v447 = vunpack.c.l.b16 %v408
        %v448 = vunpack.c.l.b16 %v409
        %v449 = vunpack.c.l.b16 %v410
        %v450 = vunpack.c.l.b16 %v411
        %v451 = vunpack.c.l.b16 %v412
        %v452 = vunpack.c.l.b16 %v413
        %v453 = vunpack.c.l.b16 %v414
        %v454 = vunpack.c.l.b16 %v415
        %v455 = vunpack.c.l.b16 %v416
        %v456 = vunpack.c.l.b16 %v417
        %v457 = vunpack.c.l.b16 %v418
        %v458 = vunpack.c.l.b16 %v419
        %v459 = vunpack.c.l.b16 %v420
        %v460 = vunpack.c.l.b16 %v421
        %v461 = vunpack.c.l.b16 %v422
        %v462 = vunpack.c.l.b16 %v423
        %v463 = vpack.c.b16 %v448, %v447
        %v464 = vpack.c.b16 %v450, %v449
        %v465 = vpack.c.b16 %v452, %v451
        %v466 = vpack.c.b16 %v454, %v453
        %v467 = vpack.c.b16 %v456, %v455
        %v468 = vpack.c.b16 %v458, %v457
        %v469 = vpack.c.b16 %v460, %v459
        %v470 = vpack.c.b16 %v462, %v461
        %479 = vmatprep.subr.bf16.mxu0 0
        %480 = vmatpush1.bf16.msra.mxu0 %v463
        %481 = vmatprep.subr.bf16.mxu0 0
        %482 = vmatpush1.bf16.msra.mxu0 %v464
        %483 = vmatprep.subr.bf16.mxu0 0
        %484 = vmatpush1.bf16.msra.mxu0 %v465
        %485 = vmatprep.subr.bf16.mxu0 0
        %486 = vmatpush1.bf16.msra.mxu0 %v466
        %487 = vmatprep.subr.bf16.mxu0 0
        %488 = vmatpush1.bf16.msra.mxu0 %v467
        %489 = vmatprep.subr.bf16.mxu0 0
        %490 = vmatpush1.bf16.msra.mxu0 %v468
        %491 = vmatprep.subr.bf16.mxu0 0
        %492 = vmatpush1.bf16.msra.mxu0 %v469
        %493 = vmatprep.subr.bf16.mxu0 0
        %494 = vmatpush1.bf16.msra.mxu0 %v470
        %495 = vmatprep.subr.bf16.mxu0 0
        %496 = vmatpush1.bf16.msra.mxu0 0
        %497 = vmatprep.subr.bf16.mxu0 0
        %498 = vmatpush1.bf16.msra.mxu0 0
        %499 = vmatprep.subr.bf16.mxu0 0
        %500 = vmatpush1.bf16.msra.mxu0 0
        %501 = vmatprep.subr.bf16.mxu0 0
        %502 = vmatpush1.bf16.msra.mxu0 0
        %503 = vmatprep.subr.bf16.mxu0 0
        %504 = vmatpush1.bf16.msra.mxu0 0
        %505 = vmatprep.subr.bf16.mxu0 0
        %506 = vmatpush1.bf16.msra.mxu0 0
        %507 = vmatprep.subr.bf16.mxu0 0
        %508 = vmatpush1.bf16.msra.mxu0 0
        %509 = vmatprep.subr.bf16.mxu0 0
        %510 = vmatpush1.bf16.msra.mxu0 0
        %511 = vmatprep.mubr.bf16.mxu0 0
        %512 = vmatmul.mubr.bf16.gmra.mrb[0].mxu0 %v376
        %v513 = vpop.f32.mrb[0].mxu0
        %v514 = vadd.f32 %v429, %v513
        %v515 = vpop.f32.mrb[0].mxu0
        %v516 = vpop.f32.mrb[0].mxu0
        %v517 = vadd.f32 %v429, %v516
        %v518 = vpop.f32.mrb[0].mxu0
        %519 = vmatprep.mubr.bf16.mxu0 0
        %520 = vmatmul.mubr.bf16.gmra.mrb[0].mxu0 %v377
        %v521 = vpop.f32.mrb[0].mxu0
        %v522 = vadd.f32 %v429, %v521
        %v523 = vpop.f32.mrb[0].mxu0
        %v524 = vpop.f32.mrb[0].mxu0
        %v525 = vadd.f32 %v429, %v524
        %v526 = vpop.f32.mrb[0].mxu0
        %527 = vmatprep.mubr.bf16.mxu0 0
        %528 = vmatmul.mubr.bf16.gmra.mrb[0].mxu0 %v378
        %v529 = vpop.f32.mrb[0].mxu0
        %v530 = vadd.f32 %v429, %v529
        %v531 = vpop.f32.mrb[0].mxu0
        %v532 = vpop.f32.mrb[0].mxu0
        %v533 = vadd.f32 %v429, %v532
        %v534 = vpop.f32.mrb[0].mxu0
        %535 = vmatprep.mubr.bf16.mxu0 0
        %536 = vmatmul.mubr.bf16.gmra.mrb[0].mxu0 %v379
        %v537 = vpop.f32.mrb[0].mxu0
        %v538 = vadd.f32 %v429, %v537
        %v539 = vpop.f32.mrb[0].mxu0
        %v540 = vpop.f32.mrb[0].mxu0
        %v541 = vadd.f32 %v429, %v540
        %v542 = vpop.f32.mrb[0].mxu0
        %543 = vmatprep.mubr.bf16.mxu0 0
        %544 = vmatmul.mubr.bf16.gmra.mrb[0].mxu0 %v380
        %v545 = vpop.f32.mrb[0].mxu0
        %v546 = vadd.f32 %v429, %v545
        %v547 = vpop.f32.mrb[0].mxu0
        %v548 = vpop.f32.mrb[0].mxu0
        %v549 = vadd.f32 %v429, %v548
        %v550 = vpop.f32.mrb[0].mxu0
        %551 = vmatprep.mubr.bf16.mxu0 0
        %552 = vmatmul.mubr.bf16.gmra.mrb[0].mxu0 %v381
        %v553 = vpop.f32.mrb[0].mxu0
        %v554 = vadd.f32 %v429, %v553
        %v555 = vpop.f32.mrb[0].mxu0
        %v556 = vpop.f32.mrb[0].mxu0
        %v557 = vadd.f32 %v429, %v556
        %v558 = vpop.f32.mrb[0].mxu0
        %559 = vmatprep.mubr.bf16.mxu0 0
        %560 = vmatmul.mubr.bf16.gmra.mrb[0].mxu0 %v382
        %v561 = vpop.f32.mrb[0].mxu0
        %v562 = vadd.f32 %v429, %v561
        %v563 = vpop.f32.mrb[0].mxu0
        %v564 = vpop.f32.mrb[0].mxu0
        %v565 = vadd.f32 %v429, %v564
        %v566 = vpop.f32.mrb[0].mxu0
        %567 = vmatprep.mubr.bf16.mxu0 0
        %568 = vmatmul.mubr.bf16.gmra.mrb[0].mxu0 %v383
        %v569 = vpop.f32.mrb[0].mxu0
        %v570 = vadd.f32 %v429, %v569
        %v571 = vpop.f32.mrb[0].mxu0
        %v572 = vpop.f32.mrb[0].mxu0
        %v573 = vadd.f32 %v429, %v572
        %v574 = vpop.f32.mrb[0].mxu0
        %575 = vmatprep.mubr.bf16.mxu0 0
        %576 = vmatmul.mubr.bf16.gmra.mrb[0].mxu0 %v384
        %v577 = vpop.f32.mrb[0].mxu0
        %v578 = vadd.f32 %v429, %v577
        %v579 = vpop.f32.mrb[0].mxu0
        %v580 = vpop.f32.mrb[0].mxu0
        %v581 = vadd.f32 %v429, %v580
        %v582 = vpop.f32.mrb[0].mxu0
        %583 = vmatprep.mubr.bf16.mxu0 0
        %584 = vmatmul.mubr.bf16.gmra.mrb[0].mxu0 %v385
        %v585 = vpop.f32.mrb[0].mxu0
        %v586 = vadd.f32 %v429, %v585
        %v587 = vpop.f32.mrb[0].mxu0
        %v588 = vpop.f32.mrb[0].mxu0
        %v589 = vadd.f32 %v429, %v588
        %v590 = vpop.f32.mrb[0].mxu0
        %591 = vmatprep.mubr.bf16.mxu0 0
        %592 = vmatmul.mubr.bf16.gmra.mrb[0].mxu0 %v386
        %v593 = vpop.f32.mrb[0].mxu0
        %v594 = vadd.f32 %v429, %v593
        %v595 = vpop.f32.mrb[0].mxu0
        %v596 = vpop.f32.mrb[0].mxu0
        %v597 = vadd.f32 %v429, %v596
        %v598 = vpop.f32.mrb[0].mxu0
        %599 = vmatprep.mubr.bf16.mxu0 0
        %600 = vmatmul.mubr.bf16.gmra.mrb[0].mxu0 %v387
        %v601 = vpop.f32.mrb[0].mxu0
        %v602 = vadd.f32 %v429, %v601
        %v603 = vpop.f32.mrb[0].mxu0
        %v604 = vpop.f32.mrb[0].mxu0
        %v605 = vadd.f32 %v429, %v604
        %v606 = vpop.f32.mrb[0].mxu0
        %607 = vmatprep.mubr.bf16.mxu0 0
        %608 = vmatmul.mubr.bf16.gmra.mrb[0].mxu0 %v388
        %v609 = vpop.f32.mrb[0].mxu0
        %v610 = vadd.f32 %v429, %v609
        %v611 = vpop.f32.mrb[0].mxu0
        %v612 = vpop.f32.mrb[0].mxu0
        %v613 = vadd.f32 %v429, %v612
        %v614 = vpop.f32.mrb[0].mxu0
        %615 = vmatprep.mubr.bf16.mxu0 0
        %616 = vmatmul.mubr.bf16.gmra.mrb[0].mxu0 %v389
        %v617 = vpop.f32.mrb[0].mxu0
        %v618 = vadd.f32 %v429, %v617
        %v619 = vpop.f32.mrb[0].mxu0
        %v620 = vpop.f32.mrb[0].mxu0
        %v621 = vadd.f32 %v429, %v620
        %v622 = vpop.f32.mrb[0].mxu0
        %623 = vmatprep.mubr.bf16.mxu0 0
        %624 = vmatmul.mubr.bf16.gmra.mrb[0].mxu0 %v390
        %v625 = vpop.f32.mrb[0].mxu0
        %v626 = vadd.f32 %v429, %v625
        %v627 = vpop.f32.mrb[0].mxu0
        %v628 = vpop.f32.mrb[0].mxu0
        %v629 = vadd.f32 %v429, %v628
        %v630 = vpop.f32.mrb[0].mxu0
        %631 = vmatprep.mubr.bf16.mxu0 0
        %632 = vmatmul.mubr.bf16.gmra.mrb[0].mxu0 %v391
        %v633 = vpop.f32.mrb[0].mxu0
        %v634 = vadd.f32 %v429, %v633
        %v635 = vpop.f32.mrb[0].mxu0
        %v636 = vpop.f32.mrb[0].mxu0
        %v637 = vadd.f32 %v429, %v636
        %v638 = vpop.f32.mrb[0].mxu0
        %639 = vmatprep.mubr.bf16.mxu0 0
        %640 = vmatmul.mubr.bf16.gmra.mrb[0].mxu0 %v392
        %v641 = vpop.f32.mrb[0].mxu0
        %v642 = vadd.f32 %v429, %v641
        %v643 = vpop.f32.mrb[0].mxu0
        %v644 = vpop.f32.mrb[0].mxu0
        %v645 = vadd.f32 %v429, %v644
        %v646 = vpop.f32.mrb[0].mxu0
        %647 = vmatprep.mubr.bf16.mxu0 0
        %648 = vmatmul.mubr.bf16.gmra.mrb[0].mxu0 %v393
        %v649 = vpop.f32.mrb[0].mxu0
        %v650 = vadd.f32 %v429, %v649
        %v651 = vpop.f32.mrb[0].mxu0
        %v652 = vpop.f32.mrb[0].mxu0
        %v653 = vadd.f32 %v429, %v652
        %v654 = vpop.f32.mrb[0].mxu0
        %655 = vmatprep.mubr.bf16.mxu0 0
        %656 = vmatmul.mubr.bf16.gmra.mrb[0].mxu0 %v394
        %v657 = vpop.f32.mrb[0].mxu0
        %v658 = vadd.f32 %v429, %v657
        %v659 = vpop.f32.mrb[0].mxu0
        %v660 = vpop.f32.mrb[0].mxu0
        %v661 = vadd.f32 %v429, %v660
        %v662 = vpop.f32.mrb[0].mxu0
        %663 = vmatprep.mubr.bf16.mxu0 0
        %664 = vmatmul.mubr.bf16.gmra.mrb[0].mxu0 %v395
        %v665 = vpop.f32.mrb[0].mxu0
        %v666 = vadd.f32 %v429, %v665
        %v667 = vpop.f32.mrb[0].mxu0
        %v668 = vpop.f32.mrb[0].mxu0
        %v669 = vadd.f32 %v429, %v668
        %v670 = vpop.f32.mrb[0].mxu0
        %671 = vmatprep.mubr.bf16.mxu0 0
        %672 = vmatmul.mubr.bf16.gmra.mrb[0].mxu0 %v396
        %v673 = vpop.f32.mrb[0].mxu0
        %v674 = vadd.f32 %v429, %v673
        %v675 = vpop.f32.mrb[0].mxu0
        %v676 = vpop.f32.mrb[0].mxu0
        %v677 = vadd.f32 %v429, %v676
        %v678 = vpop.f32.mrb[0].mxu0
        %679 = vmatprep.mubr.bf16.mxu0 0
        %680 = vmatmul.mubr.bf16.gmra.mrb[0].mxu0 %v397
        %v681 = vpop.f32.mrb[0].mxu0
        %v682 = vadd.f32 %v429, %v681
        %v683 = vpop.f32.mrb[0].mxu0
        %v684 = vpop.f32.mrb[0].mxu0
        %v685 = vadd.f32 %v429, %v684
        %v686 = vpop.f32.mrb[0].mxu0
        %687 = vmatprep.mubr.bf16.mxu0 0
        %688 = vmatmul.mubr.bf16.gmra.mrb[0].mxu0 %v398
        %v689 = vpop.f32.mrb[0].mxu0
        %v690 = vadd.f32 %v429, %v689
        %v691 = vpop.f32.mrb[0].mxu0
        %v692 = vpop.f32.mrb[0].mxu0
        %v693 = vadd.f32 %v429, %v692
        %v694 = vpop.f32.mrb[0].mxu0
        %695 = vmatprep.mubr.bf16.mxu0 0
        %696 = vmatmul.mubr.bf16.gmra.mrb[0].mxu0 %v399
        %v697 = vpop.f32.mrb[0].mxu0
        %v698 = vadd.f32 %v429, %v697
        %v699 = vpop.f32.mrb[0].mxu0
        %v700 = vpop.f32.mrb[0].mxu0
        %v701 = vadd.f32 %v429, %v700
        %v702 = vpop.f32.mrb[0].mxu0
        %703 = vmatprep.mubr.bf16.mxu0 0
        %704 = vmatmul.mubr.bf16.gmra.mrb[0].mxu0 %v400
        %v705 = vpop.f32.mrb[0].mxu0
        %v706 = vadd.f32 %v429, %v705
        %v707 = vpop.f32.mrb[0].mxu0
        %v708 = vpop.f32.mrb[0].mxu0
        %v709 = vadd.f32 %v429, %v708
        %v710 = vpop.f32.mrb[0].mxu0
        %711 = vmatprep.mubr.bf16.mxu0 0
        %712 = vmatmul.mubr.bf16.gmra.mrb[0].mxu0 %v401
        %v713 = vpop.f32.mrb[0].mxu0
        %v714 = vadd.f32 %v429, %v713
        %v715 = vpop.f32.mrb[0].mxu0
        %v716 = vpop.f32.mrb[0].mxu0
        %v717 = vadd.f32 %v429, %v716
        %v718 = vpop.f32.mrb[0].mxu0
        %719 = vmatprep.mubr.bf16.mxu0 0
        %720 = vmatmul.mubr.bf16.gmra.mrb[0].mxu0 %v402
        %v721 = vpop.f32.mrb[0].mxu0
        %v722 = vadd.f32 %v429, %v721
        %v723 = vpop.f32.mrb[0].mxu0
        %v724 = vpop.f32.mrb[0].mxu0
        %v725 = vadd.f32 %v429, %v724
        %v726 = vpop.f32.mrb[0].mxu0
        %727 = vmatprep.mubr.bf16.mxu0 0
        %728 = vmatmul.mubr.bf16.gmra.mrb[0].mxu0 %v403
        %v729 = vpop.f32.mrb[0].mxu0
        %v730 = vadd.f32 %v429, %v729
        %v731 = vpop.f32.mrb[0].mxu0
        %v732 = vpop.f32.mrb[0].mxu0
        %v733 = vadd.f32 %v429, %v732
        %v734 = vpop.f32.mrb[0].mxu0
        %735 = vmatprep.mubr.bf16.mxu0 0
        %736 = vmatmul.mubr.bf16.gmra.mrb[0].mxu0 %v404
        %v737 = vpop.f32.mrb[0].mxu0
        %v738 = vadd.f32 %v429, %v737
        %v739 = vpop.f32.mrb[0].mxu0
        %v740 = vpop.f32.mrb[0].mxu0
        %v741 = vadd.f32 %v429, %v740
        %v742 = vpop.f32.mrb[0].mxu0
        %743 = vmatprep.mubr.bf16.mxu0 0
        %744 = vmatmul.mubr.bf16.gmra.mrb[0].mxu0 %v405
        %v745 = vpop.f32.mrb[0].mxu0
        %v746 = vadd.f32 %v429, %v745
        %v747 = vpop.f32.mrb[0].mxu0
        %v748 = vpop.f32.mrb[0].mxu0
        %v749 = vadd.f32 %v429, %v748
        %v750 = vpop.f32.mrb[0].mxu0
        %751 = vmatprep.mubr.bf16.mxu0 0
        %752 = vmatmul.mubr.bf16.gmra.mrb[0].mxu0 %v406
        %v753 = vpop.f32.mrb[0].mxu0
        %v754 = vadd.f32 %v429, %v753
        %v755 = vpop.f32.mrb[0].mxu0
        %v756 = vpop.f32.mrb[0].mxu0
        %v757 = vadd.f32 %v429, %v756
        %v758 = vpop.f32.mrb[0].mxu0
        %759 = vmatprep.mubr.bf16.mxu0 0
        %760 = vmatmul.mubr.bf16.gmra.mrb[0].mxu0 %v407
        %v761 = vpop.f32.mrb[0].mxu0
        %v762 = vadd.f32 %v429, %v761
        %v763 = vpop.f32.mrb[0].mxu0
        %v764 = vpop.f32.mrb[0].mxu0
        %v765 = vadd.f32 %v429, %v764
        %v766 = vpop.f32.mrb[0].mxu0
        %767 = vdwg.mxu0
        %v768 = vmax.f32 %v514, 0.0
        %v769 = vmax.f32 %v517, 0.0
        %v770 = vmax.f32 %v522, 0.0
        %v771 = vmax.f32 %v525, 0.0
        %v772 = vmax.f32 %v530, 0.0
        %v773 = vmax.f32 %v533, 0.0
        %v774 = vmax.f32 %v538, 0.0
        %v775 = vmax.f32 %v541, 0.0
        %v776 = vmax.f32 %v546, 0.0
        %v777 = vmax.f32 %v549, 0.0
        %v778 = vmax.f32 %v554, 0.0
        %v779 = vmax.f32 %v557, 0.0
        %v780 = vmax.f32 %v562, 0.0
        %v781 = vmax.f32 %v565, 0.0
        %v782 = vmax.f32 %v570, 0.0
        %v783 = vmax.f32 %v573, 0.0
        %v784 = vmax.f32 %v578, 0.0
        %v785 = vmax.f32 %v581, 0.0
        %v786 = vmax.f32 %v586, 0.0
        %v787 = vmax.f32 %v589, 0.0
        %v788 = vmax.f32 %v594, 0.0
        %v789 = vmax.f32 %v597, 0.0
        %v790 = vmax.f32 %v602, 0.0
        %v791 = vmax.f32 %v605, 0.0
        %v792 = vmax.f32 %v610, 0.0
        %v793 = vmax.f32 %v613, 0.0
        %v794 = vmax.f32 %v618, 0.0
        %v795 = vmax.f32 %v621, 0.0
        %v796 = vmax.f32 %v626, 0.0
        %v797 = vmax.f32 %v629, 0.0
        %v798 = vmax.f32 %v634, 0.0
        %v799 = vmax.f32 %v637, 0.0
        %v800 = vmax.f32 %v642, 0.0
        %v801 = vmax.f32 %v645, 0.0
        %v802 = vmax.f32 %v650, 0.0
        %v803 = vmax.f32 %v653, 0.0
        %v804 = vmax.f32 %v658, 0.0
        %v805 = vmax.f32 %v661, 0.0
        %v806 = vmax.f32 %v666, 0.0
        %v807 = vmax.f32 %v669, 0.0
        %v808 = vmax.f32 %v674, 0.0
        %v809 = vmax.f32 %v677, 0.0
        %v810 = vmax.f32 %v682, 0.0
        %v811 = vmax.f32 %v685, 0.0
        %v812 = vmax.f32 %v690, 0.0
        %v813 = vmax.f32 %v693, 0.0
        %v814 = vmax.f32 %v698, 0.0
        %v815 = vmax.f32 %v701, 0.0
        %v816 = vmax.f32 %v706, 0.0
        %v817 = vmax.f32 %v709, 0.0
        %v818 = vmax.f32 %v714, 0.0
        %v819 = vmax.f32 %v717, 0.0
        %v820 = vmax.f32 %v722, 0.0
        %v821 = vmax.f32 %v725, 0.0
        %v822 = vmax.f32 %v730, 0.0
        %v823 = vmax.f32 %v733, 0.0
        %v824 = vmax.f32 %v738, 0.0
        %v825 = vmax.f32 %v741, 0.0
        %v826 = vmax.f32 %v746, 0.0
        %v827 = vmax.f32 %v749, 0.0
        %v828 = vmax.f32 %v754, 0.0
        %v829 = vmax.f32 %v757, 0.0
        %v830 = vmax.f32 %v762, 0.0
        %v831 = vmax.f32 %v765, 0.0
        %v832 = vpack.c.bf16 %v769, %v768
        %v833 = vpack.c.bf16 %v771, %v770
        %v834 = vpack.c.bf16 %v773, %v772
        %v835 = vpack.c.bf16 %v775, %v774
        %v836 = vpack.c.bf16 %v777, %v776
        %v837 = vpack.c.bf16 %v779, %v778
        %v838 = vpack.c.bf16 %v781, %v780
        %v839 = vpack.c.bf16 %v783, %v782
        %v840 = vpack.c.bf16 %v785, %v784
        %v841 = vpack.c.bf16 %v787, %v786
        %v842 = vpack.c.bf16 %v789, %v788
        %v843 = vpack.c.bf16 %v791, %v790
        %v844 = vpack.c.bf16 %v793, %v792
        %v845 = vpack.c.bf16 %v795, %v794
        %v846 = vpack.c.bf16 %v797, %v796
        %v847 = vpack.c.bf16 %v799, %v798
        %v848 = vpack.c.bf16 %v801, %v800
        %v849 = vpack.c.bf16 %v803, %v802
        %v850 = vpack.c.bf16 %v805, %v804
        %v851 = vpack.c.bf16 %v807, %v806
        %v852 = vpack.c.bf16 %v809, %v808
        %v853 = vpack.c.bf16 %v811, %v810
        %v854 = vpack.c.bf16 %v813, %v812
        %v855 = vpack.c.bf16 %v815, %v814
        %v856 = vpack.c.bf16 %v817, %v816
        %v857 = vpack.c.bf16 %v819, %v818
        %v858 = vpack.c.bf16 %v821, %v820
        %v859 = vpack.c.bf16 %v823, %v822
        %v860 = vpack.c.bf16 %v825, %v824
        %v861 = vpack.c.bf16 %v827, %v826
        %v862 = vpack.c.bf16 %v829, %v828
        %v863 = vpack.c.bf16 %v831, %v830
        %v864 = vld [vmem:[%s3] sm:$0xf]
        %v865 = vld [vmem:[%s3 + $0x4] sm:$0xf]
        %v866 = vld [vmem:[%s3 + $0x8] sm:$0xf]
        %v867 = vld [vmem:[%s3 + $0xc] sm:$0xf]
        %v868 = vld [vmem:[%s3 + $0x10] sm:$0xf]
        %v869 = vld [vmem:[%s3 + $0x14] sm:$0xf]
        %v870 = vld [vmem:[%s3 + $0x18] sm:$0xf]
        %v871 = vld [vmem:[%s3 + $0x1c] sm:$0xf]
        %v872 = vld [vmem:[%s3 + $0x20] sm:$0xf]
        %v873 = vld [vmem:[%s3 + $0x24] sm:$0xf]
        %v874 = vld [vmem:[%s3 + $0x28] sm:$0xf]
        %v875 = vld [vmem:[%s3 + $0x2c] sm:$0xf]
        %v876 = vld [vmem:[%s3 + $0x30] sm:$0xf]
        %v877 = vld [vmem:[%s3 + $0x34] sm:$0xf]
        %v878 = vld [vmem:[%s3 + $0x38] sm:$0xf]
        %v879 = vld [vmem:[%s3 + $0x3c] sm:$0xf]
        %v880 = vld [vmem:[%s4] sm:$0x1]
        %v882 = vlaneseq
        %v883 = vshrl.u32 %v882, 7
        %v884 = vsub.s32 0, %v883
        %v885 = vrot.slane %v880, %v884
        %v903 = vunpack.c.l.b16 %v864
        %v904 = vunpack.c.l.b16 %v865
        %v905 = vunpack.c.l.b16 %v866
        %v906 = vunpack.c.l.b16 %v867
        %v907 = vunpack.c.l.b16 %v868
        %v908 = vunpack.c.l.b16 %v869
        %v909 = vunpack.c.l.b16 %v870
        %v910 = vunpack.c.l.b16 %v871
        %v911 = vunpack.c.l.b16 %v872
        %v912 = vunpack.c.l.b16 %v873
        %v913 = vunpack.c.l.b16 %v874
        %v914 = vunpack.c.l.b16 %v875
        %v915 = vunpack.c.l.b16 %v876
        %v916 = vunpack.c.l.b16 %v877
        %v917 = vunpack.c.l.b16 %v878
        %v918 = vunpack.c.l.b16 %v879
        %v919 = vpack.c.b16 %v904, %v903
        %v920 = vpack.c.b16 %v906, %v905
        %v921 = vpack.c.b16 %v908, %v907
        %v922 = vpack.c.b16 %v910, %v909
        %v923 = vpack.c.b16 %v912, %v911
        %v924 = vpack.c.b16 %v914, %v913
        %v925 = vpack.c.b16 %v916, %v915
        %v926 = vpack.c.b16 %v918, %v917
        %935 = vmatprep.subr.bf16.mxu0 0
        %936 = vmatpush1.bf16.msra.mxu0 %v919
        %937 = vmatprep.subr.bf16.mxu0 0
        %938 = vmatpush1.bf16.msra.mxu0 %v920
        %939 = vmatprep.subr.bf16.mxu0 0
        %940 = vmatpush1.bf16.msra.mxu0 %v921
        %941 = vmatprep.subr.bf16.mxu0 0
        %942 = vmatpush1.bf16.msra.mxu0 %v922
        %943 = vmatprep.subr.bf16.mxu0 0
        %944 = vmatpush1.bf16.msra.mxu0 %v923
        %945 = vmatprep.subr.bf16.mxu0 0
        %946 = vmatpush1.bf16.msra.mxu0 %v924
        %947 = vmatprep.subr.bf16.mxu0 0
        %948 = vmatpush1.bf16.msra.mxu0 %v925
        %949 = vmatprep.subr.bf16.mxu0 0
        %950 = vmatpush1.bf16.msra.mxu0 %v926
        %951 = vmatprep.subr.bf16.mxu0 0
        %952 = vmatpush1.bf16.msra.mxu0 0
        %953 = vmatprep.subr.bf16.mxu0 0
        %954 = vmatpush1.bf16.msra.mxu0 0
        %955 = vmatprep.subr.bf16.mxu0 0
        %956 = vmatpush1.bf16.msra.mxu0 0
        %957 = vmatprep.subr.bf16.mxu0 0
        %958 = vmatpush1.bf16.msra.mxu0 0
        %959 = vmatprep.subr.bf16.mxu0 0
        %960 = vmatpush1.bf16.msra.mxu0 0
        %961 = vmatprep.subr.bf16.mxu0 0
        %962 = vmatpush1.bf16.msra.mxu0 0
        %963 = vmatprep.subr.bf16.mxu0 0
        %964 = vmatpush1.bf16.msra.mxu0 0
        %965 = vmatprep.subr.bf16.mxu0 0
        %966 = vmatpush1.bf16.msra.mxu0 0
        %967 = vmatprep.mubr.bf16.mxu0 0
        %968 = vmatmul.mubr.bf16.gmra.mrb[0].mxu0 %v832
        %v969 = vpop.f32.mrb[0].mxu0
        %v970 = vadd.f32 %v885, %v969
        %v971 = vpop.f32.mrb[0].mxu0
        %v972 = vpop.f32.mrb[0].mxu0
        %v973 = vadd.f32 %v885, %v972
        %v974 = vpop.f32.mrb[0].mxu0
        %975 = vmatprep.mubr.bf16.mxu0 0
        %976 = vmatmul.mubr.bf16.gmra.mrb[0].mxu0 %v833
        %v977 = vpop.f32.mrb[0].mxu0
        %v978 = vadd.f32 %v885, %v977
        %v979 = vpop.f32.mrb[0].mxu0
        %v980 = vpop.f32.mrb[0].mxu0
        %v981 = vadd.f32 %v885, %v980
        %v982 = vpop.f32.mrb[0].mxu0
        %983 = vmatprep.mubr.bf16.mxu0 0
        %984 = vmatmul.mubr.bf16.gmra.mrb[0].mxu0 %v834
        %v985 = vpop.f32.mrb[0].mxu0
        %v986 = vadd.f32 %v885, %v985
        %v987 = vpop.f32.mrb[0].mxu0
        %v988 = vpop.f32.mrb[0].mxu0
        %v989 = vadd.f32 %v885, %v988
        %v990 = vpop.f32.mrb[0].mxu0
        %991 = vmatprep.mubr.bf16.mxu0 0
        %992 = vmatmul.mubr.bf16.gmra.mrb[0].mxu0 %v835
        %v993 = vpop.f32.mrb[0].mxu0
        %v994 = vadd.f32 %v885, %v993
        %v995 = vpop.f32.mrb[0].mxu0
        %v996 = vpop.f32.mrb[0].mxu0
        %v997 = vadd.f32 %v885, %v996
        %v998 = vpop.f32.mrb[0].mxu0
        %999 = vmatprep.mubr.bf16.mxu0 0
        %1000 = vmatmul.mubr.bf16.gmra.mrb[0].mxu0 %v836
        %v1001 = vpop.f32.mrb[0].mxu0
        %v1002 = vadd.f32 %v885, %v1001
        %v1003 = vpop.f32.mrb[0].mxu0
        %v1004 = vpop.f32.mrb[0].mxu0
        %v1005 = vadd.f32 %v885, %v1004
        %v1006 = vpop.f32.mrb[0].mxu0
        %1007 = vmatprep.mubr.bf16.mxu0 0
        %1008 = vmatmul.mubr.bf16.gmra.mrb[0].mxu0 %v837
        %v1009 = vpop.f32.mrb[0].mxu0
        %v1010 = vadd.f32 %v885, %v1009
        %v1011 = vpop.f32.mrb[0].mxu0
        %v1012 = vpop.f32.mrb[0].mxu0
        %v1013 = vadd.f32 %v885, %v1012
        %v1014 = vpop.f32.mrb[0].mxu0
        %1015 = vmatprep.mubr.bf16.mxu0 0
        %1016 = vmatmul.mubr.bf16.gmra.mrb[0].mxu0 %v838
        %v1017 = vpop.f32.mrb[0].mxu0
        %v1018 = vadd.f32 %v885, %v1017
        %v1019 = vpop.f32.mrb[0].mxu0
        %v1020 = vpop.f32.mrb[0].mxu0
        %v1021 = vadd.f32 %v885, %v1020
        %v1022 = vpop.f32.mrb[0].mxu0
        %1023 = vmatprep.mubr.bf16.mxu0 0
        %1024 = vmatmul.mubr.bf16.gmra.mrb[0].mxu0 %v839
        %v1025 = vpop.f32.mrb[0].mxu0
        %v1026 = vadd.f32 %v885, %v1025
        %v1027 = vpop.f32.mrb[0].mxu0
        %v1028 = vpop.f32.mrb[0].mxu0
        %v1029 = vadd.f32 %v885, %v1028
        %v1030 = vpop.f32.mrb[0].mxu0
        %1031 = vmatprep.mubr.bf16.mxu0 0
        %1032 = vmatmul.mubr.bf16.gmra.mrb[0].mxu0 %v840
        %v1033 = vpop.f32.mrb[0].mxu0
        %v1034 = vadd.f32 %v885, %v1033
        %v1035 = vpop.f32.mrb[0].mxu0
        %v1036 = vpop.f32.mrb[0].mxu0
        %v1037 = vadd.f32 %v885, %v1036
        %v1038 = vpop.f32.mrb[0].mxu0
        %1039 = vmatprep.mubr.bf16.mxu0 0
        %1040 = vmatmul.mubr.bf16.gmra.mrb[0].mxu0 %v841
        %v1041 = vpop.f32.mrb[0].mxu0
        %v1042 = vadd.f32 %v885, %v1041
        %v1043 = vpop.f32.mrb[0].mxu0
        %v1044 = vpop.f32.mrb[0].mxu0
        %v1045 = vadd.f32 %v885, %v1044
        %v1046 = vpop.f32.mrb[0].mxu0
        %1047 = vmatprep.mubr.bf16.mxu0 0
        %1048 = vmatmul.mubr.bf16.gmra.mrb[0].mxu0 %v842
        %v1049 = vpop.f32.mrb[0].mxu0
        %v1050 = vadd.f32 %v885, %v1049
        %v1051 = vpop.f32.mrb[0].mxu0
        %v1052 = vpop.f32.mrb[0].mxu0
        %v1053 = vadd.f32 %v885, %v1052
        %v1054 = vpop.f32.mrb[0].mxu0
        %1055 = vmatprep.mubr.bf16.mxu0 0
        %1056 = vmatmul.mubr.bf16.gmra.mrb[0].mxu0 %v843
        %v1057 = vpop.f32.mrb[0].mxu0
        %v1058 = vadd.f32 %v885, %v1057
        %v1059 = vpop.f32.mrb[0].mxu0
        %v1060 = vpop.f32.mrb[0].mxu0
        %v1061 = vadd.f32 %v885, %v1060
        %v1062 = vpop.f32.mrb[0].mxu0
        %1063 = vmatprep.mubr.bf16.mxu0 0
        %1064 = vmatmul.mubr.bf16.gmra.mrb[0].mxu0 %v844
        %v1065 = vpop.f32.mrb[0].mxu0
        %v1066 = vadd.f32 %v885, %v1065
        %v1067 = vpop.f32.mrb[0].mxu0
        %v1068 = vpop.f32.mrb[0].mxu0
        %v1069 = vadd.f32 %v885, %v1068
        %v1070 = vpop.f32.mrb[0].mxu0
        %1071 = vmatprep.mubr.bf16.mxu0 0
        %1072 = vmatmul.mubr.bf16.gmra.mrb[0].mxu0 %v845
        %v1073 = vpop.f32.mrb[0].mxu0
        %v1074 = vadd.f32 %v885, %v1073
        %v1075 = vpop.f32.mrb[0].mxu0
        %v1076 = vpop.f32.mrb[0].mxu0
        %v1077 = vadd.f32 %v885, %v1076
        %v1078 = vpop.f32.mrb[0].mxu0
        %1079 = vmatprep.mubr.bf16.mxu0 0
        %1080 = vmatmul.mubr.bf16.gmra.mrb[0].mxu0 %v846
        %v1081 = vpop.f32.mrb[0].mxu0
        %v1082 = vadd.f32 %v885, %v1081
        %v1083 = vpop.f32.mrb[0].mxu0
        %v1084 = vpop.f32.mrb[0].mxu0
        %v1085 = vadd.f32 %v885, %v1084
        %v1086 = vpop.f32.mrb[0].mxu0
        %1087 = vmatprep.mubr.bf16.mxu0 0
        %1088 = vmatmul.mubr.bf16.gmra.mrb[0].mxu0 %v847
        %v1089 = vpop.f32.mrb[0].mxu0
        %v1090 = vadd.f32 %v885, %v1089
        %v1091 = vpop.f32.mrb[0].mxu0
        %v1092 = vpop.f32.mrb[0].mxu0
        %v1093 = vadd.f32 %v885, %v1092
        %v1094 = vpop.f32.mrb[0].mxu0
        %1095 = vmatprep.mubr.bf16.mxu0 0
        %1096 = vmatmul.mubr.bf16.gmra.mrb[0].mxu0 %v848
        %v1097 = vpop.f32.mrb[0].mxu0
        %v1098 = vadd.f32 %v885, %v1097
        %v1099 = vpop.f32.mrb[0].mxu0
        %v1100 = vpop.f32.mrb[0].mxu0
        %v1101 = vadd.f32 %v885, %v1100
        %v1102 = vpop.f32.mrb[0].mxu0
        %1103 = vmatprep.mubr.bf16.mxu0 0
        %1104 = vmatmul.mubr.bf16.gmra.mrb[0].mxu0 %v849
        %v1105 = vpop.f32.mrb[0].mxu0
        %v1106 = vadd.f32 %v885, %v1105
        %v1107 = vpop.f32.mrb[0].mxu0
        %v1108 = vpop.f32.mrb[0].mxu0
        %v1109 = vadd.f32 %v885, %v1108
        %v1110 = vpop.f32.mrb[0].mxu0
        %1111 = vmatprep.mubr.bf16.mxu0 0
        %1112 = vmatmul.mubr.bf16.gmra.mrb[0].mxu0 %v850
        %v1113 = vpop.f32.mrb[0].mxu0
        %v1114 = vadd.f32 %v885, %v1113
        %v1115 = vpop.f32.mrb[0].mxu0
        %v1116 = vpop.f32.mrb[0].mxu0
        %v1117 = vadd.f32 %v885, %v1116
        %v1118 = vpop.f32.mrb[0].mxu0
        %1119 = vmatprep.mubr.bf16.mxu0 0
        %1120 = vmatmul.mubr.bf16.gmra.mrb[0].mxu0 %v851
        %v1121 = vpop.f32.mrb[0].mxu0
        %v1122 = vadd.f32 %v885, %v1121
        %v1123 = vpop.f32.mrb[0].mxu0
        %v1124 = vpop.f32.mrb[0].mxu0
        %v1125 = vadd.f32 %v885, %v1124
        %v1126 = vpop.f32.mrb[0].mxu0
        %1127 = vmatprep.mubr.bf16.mxu0 0
        %1128 = vmatmul.mubr.bf16.gmra.mrb[0].mxu0 %v852
        %v1129 = vpop.f32.mrb[0].mxu0
        %v1130 = vadd.f32 %v885, %v1129
        %v1131 = vpop.f32.mrb[0].mxu0
        %v1132 = vpop.f32.mrb[0].mxu0
        %v1133 = vadd.f32 %v885, %v1132
        %v1134 = vpop.f32.mrb[0].mxu0
        %1135 = vmatprep.mubr.bf16.mxu0 0
        %1136 = vmatmul.mubr.bf16.gmra.mrb[0].mxu0 %v853
        %v1137 = vpop.f32.mrb[0].mxu0
        %v1138 = vadd.f32 %v885, %v1137
        %v1139 = vpop.f32.mrb[0].mxu0
        %v1140 = vpop.f32.mrb[0].mxu0
        %v1141 = vadd.f32 %v885, %v1140
        %v1142 = vpop.f32.mrb[0].mxu0
        %1143 = vmatprep.mubr.bf16.mxu0 0
        %1144 = vmatmul.mubr.bf16.gmra.mrb[0].mxu0 %v854
        %v1145 = vpop.f32.mrb[0].mxu0
        %v1146 = vadd.f32 %v885, %v1145
        %v1147 = vpop.f32.mrb[0].mxu0
        %v1148 = vpop.f32.mrb[0].mxu0
        %v1149 = vadd.f32 %v885, %v1148
        %v1150 = vpop.f32.mrb[0].mxu0
        %1151 = vmatprep.mubr.bf16.mxu0 0
        %1152 = vmatmul.mubr.bf16.gmra.mrb[0].mxu0 %v855
        %v1153 = vpop.f32.mrb[0].mxu0
        %v1154 = vadd.f32 %v885, %v1153
        %v1155 = vpop.f32.mrb[0].mxu0
        %v1156 = vpop.f32.mrb[0].mxu0
        %v1157 = vadd.f32 %v885, %v1156
        %v1158 = vpop.f32.mrb[0].mxu0
        %1159 = vmatprep.mubr.bf16.mxu0 0
        %1160 = vmatmul.mubr.bf16.gmra.mrb[0].mxu0 %v856
        %v1161 = vpop.f32.mrb[0].mxu0
        %v1162 = vadd.f32 %v885, %v1161
        %v1163 = vpop.f32.mrb[0].mxu0
        %v1164 = vpop.f32.mrb[0].mxu0
        %v1165 = vadd.f32 %v885, %v1164
        %v1166 = vpop.f32.mrb[0].mxu0
        %1167 = vmatprep.mubr.bf16.mxu0 0
        %1168 = vmatmul.mubr.bf16.gmra.mrb[0].mxu0 %v857
        %v1169 = vpop.f32.mrb[0].mxu0
        %v1170 = vadd.f32 %v885, %v1169
        %v1171 = vpop.f32.mrb[0].mxu0
        %v1172 = vpop.f32.mrb[0].mxu0
        %v1173 = vadd.f32 %v885, %v1172
        %v1174 = vpop.f32.mrb[0].mxu0
        %1175 = vmatprep.mubr.bf16.mxu0 0
        %1176 = vmatmul.mubr.bf16.gmra.mrb[0].mxu0 %v858
        %v1177 = vpop.f32.mrb[0].mxu0
        %v1178 = vadd.f32 %v885, %v1177
        %v1179 = vpop.f32.mrb[0].mxu0
        %v1180 = vpop.f32.mrb[0].mxu0
        %v1181 = vadd.f32 %v885, %v1180
        %v1182 = vpop.f32.mrb[0].mxu0
        %1183 = vmatprep.mubr.bf16.mxu0 0
        %1184 = vmatmul.mubr.bf16.gmra.mrb[0].mxu0 %v859
        %v1185 = vpop.f32.mrb[0].mxu0
        %v1186 = vadd.f32 %v885, %v1185
        %v1187 = vpop.f32.mrb[0].mxu0
        %v1188 = vpop.f32.mrb[0].mxu0
        %v1189 = vadd.f32 %v885, %v1188
        %v1190 = vpop.f32.mrb[0].mxu0
        %1191 = vmatprep.mubr.bf16.mxu0 0
        %1192 = vmatmul.mubr.bf16.gmra.mrb[0].mxu0 %v860
        %v1193 = vpop.f32.mrb[0].mxu0
        %v1194 = vadd.f32 %v885, %v1193
        %v1195 = vpop.f32.mrb[0].mxu0
        %v1196 = vpop.f32.mrb[0].mxu0
        %v1197 = vadd.f32 %v885, %v1196
        %v1198 = vpop.f32.mrb[0].mxu0
        %1199 = vmatprep.mubr.bf16.mxu0 0
        %1200 = vmatmul.mubr.bf16.gmra.mrb[0].mxu0 %v861
        %v1201 = vpop.f32.mrb[0].mxu0
        %v1202 = vadd.f32 %v885, %v1201
        %v1203 = vpop.f32.mrb[0].mxu0
        %v1204 = vpop.f32.mrb[0].mxu0
        %v1205 = vadd.f32 %v885, %v1204
        %v1206 = vpop.f32.mrb[0].mxu0
        %1207 = vmatprep.mubr.bf16.mxu0 0
        %1208 = vmatmul.mubr.bf16.gmra.mrb[0].mxu0 %v862
        %v1209 = vpop.f32.mrb[0].mxu0
        %v1210 = vadd.f32 %v885, %v1209
        %v1211 = vpop.f32.mrb[0].mxu0
        %v1212 = vpop.f32.mrb[0].mxu0
        %v1213 = vadd.f32 %v885, %v1212
        %v1214 = vpop.f32.mrb[0].mxu0
        %1215 = vmatprep.mubr.bf16.mxu0 0
        %1216 = vmatmul.mubr.bf16.gmra.mrb[0].mxu0 %v863
        %v1217 = vpop.f32.mrb[0].mxu0
        %v1218 = vadd.f32 %v885, %v1217
        %v1219 = vpop.f32.mrb[0].mxu0
        %v1220 = vpop.f32.mrb[0].mxu0
        %v1221 = vadd.f32 %v885, %v1220
        %v1222 = vpop.f32.mrb[0].mxu0
        %1223 = vdwg.mxu0
        %v1224 = vmax.f32 %v970, 0.0
        %v1225 = vmax.f32 %v973, 0.0
        %v1226 = vmax.f32 %v978, 0.0
        %v1227 = vmax.f32 %v981, 0.0
        %v1228 = vmax.f32 %v986, 0.0
        %v1229 = vmax.f32 %v989, 0.0
        %v1230 = vmax.f32 %v994, 0.0
        %v1231 = vmax.f32 %v997, 0.0
        %v1232 = vmax.f32 %v1002, 0.0
        %v1233 = vmax.f32 %v1005, 0.0
        %v1234 = vmax.f32 %v1010, 0.0
        %v1235 = vmax.f32 %v1013, 0.0
        %v1236 = vmax.f32 %v1018, 0.0
        %v1237 = vmax.f32 %v1021, 0.0
        %v1238 = vmax.f32 %v1026, 0.0
        %v1239 = vmax.f32 %v1029, 0.0
        %v1240 = vmax.f32 %v1034, 0.0
        %v1241 = vmax.f32 %v1037, 0.0
        %v1242 = vmax.f32 %v1042, 0.0
        %v1243 = vmax.f32 %v1045, 0.0
        %v1244 = vmax.f32 %v1050, 0.0
        %v1245 = vmax.f32 %v1053, 0.0
        %v1246 = vmax.f32 %v1058, 0.0
        %v1247 = vmax.f32 %v1061, 0.0
        %v1248 = vmax.f32 %v1066, 0.0
        %v1249 = vmax.f32 %v1069, 0.0
        %v1250 = vmax.f32 %v1074, 0.0
        %v1251 = vmax.f32 %v1077, 0.0
        %v1252 = vmax.f32 %v1082, 0.0
        %v1253 = vmax.f32 %v1085, 0.0
        %v1254 = vmax.f32 %v1090, 0.0
        %v1255 = vmax.f32 %v1093, 0.0
        %v1256 = vmax.f32 %v1098, 0.0
        %v1257 = vmax.f32 %v1101, 0.0
        %v1258 = vmax.f32 %v1106, 0.0
        %v1259 = vmax.f32 %v1109, 0.0
        %v1260 = vmax.f32 %v1114, 0.0
        %v1261 = vmax.f32 %v1117, 0.0
        %v1262 = vmax.f32 %v1122, 0.0
        %v1263 = vmax.f32 %v1125, 0.0
        %v1264 = vmax.f32 %v1130, 0.0
        %v1265 = vmax.f32 %v1133, 0.0
        %v1266 = vmax.f32 %v1138, 0.0
        %v1267 = vmax.f32 %v1141, 0.0
        %v1268 = vmax.f32 %v1146, 0.0
        %v1269 = vmax.f32 %v1149, 0.0
        %v1270 = vmax.f32 %v1154, 0.0
        %v1271 = vmax.f32 %v1157, 0.0
        %v1272 = vmax.f32 %v1162, 0.0
        %v1273 = vmax.f32 %v1165, 0.0
        %v1274 = vmax.f32 %v1170, 0.0
        %v1275 = vmax.f32 %v1173, 0.0
        %v1276 = vmax.f32 %v1178, 0.0
        %v1277 = vmax.f32 %v1181, 0.0
        %v1278 = vmax.f32 %v1186, 0.0
        %v1279 = vmax.f32 %v1189, 0.0
        %v1280 = vmax.f32 %v1194, 0.0
        %v1281 = vmax.f32 %v1197, 0.0
        %v1282 = vmax.f32 %v1202, 0.0
        %v1283 = vmax.f32 %v1205, 0.0
        %v1284 = vmax.f32 %v1210, 0.0
        %v1285 = vmax.f32 %v1213, 0.0
        %v1286 = vmax.f32 %v1218, 0.0
        %v1287 = vmax.f32 %v1221, 0.0
        %v1288 = vpack.c.bf16 %v1225, %v1224
        %v1289 = vpack.c.bf16 %v1227, %v1226
        %v1290 = vpack.c.bf16 %v1229, %v1228
        %v1291 = vpack.c.bf16 %v1231, %v1230
        %v1292 = vpack.c.bf16 %v1233, %v1232
        %v1293 = vpack.c.bf16 %v1235, %v1234
        %v1294 = vpack.c.bf16 %v1237, %v1236
        %v1295 = vpack.c.bf16 %v1239, %v1238
        %v1296 = vpack.c.bf16 %v1241, %v1240
        %v1297 = vpack.c.bf16 %v1243, %v1242
        %v1298 = vpack.c.bf16 %v1245, %v1244
        %v1299 = vpack.c.bf16 %v1247, %v1246
        %v1300 = vpack.c.bf16 %v1249, %v1248
        %v1301 = vpack.c.bf16 %v1251, %v1250
        %v1302 = vpack.c.bf16 %v1253, %v1252
        %v1303 = vpack.c.bf16 %v1255, %v1254
        %v1304 = vpack.c.bf16 %v1257, %v1256
        %v1305 = vpack.c.bf16 %v1259, %v1258
        %v1306 = vpack.c.bf16 %v1261, %v1260
        %v1307 = vpack.c.bf16 %v1263, %v1262
        %v1308 = vpack.c.bf16 %v1265, %v1264
        %v1309 = vpack.c.bf16 %v1267, %v1266
        %v1310 = vpack.c.bf16 %v1269, %v1268
        %v1311 = vpack.c.bf16 %v1271, %v1270
        %v1312 = vpack.c.bf16 %v1273, %v1272
        %v1313 = vpack.c.bf16 %v1275, %v1274
        %v1314 = vpack.c.bf16 %v1277, %v1276
        %v1315 = vpack.c.bf16 %v1279, %v1278
        %v1316 = vpack.c.bf16 %v1281, %v1280
        %v1317 = vpack.c.bf16 %v1283, %v1282
        %v1318 = vpack.c.bf16 %v1285, %v1284
        %v1319 = vpack.c.bf16 %v1287, %v1286
        %v1320 = vld [vmem:[%s5] sm:$0xf]
        %v1321 = vld [vmem:[%s6] sm:$0xff]
        %1323 = vset.pattern.permute.xlu0 0
        %1324 = vperm.xlu0 %1323, %v1321
        %v1325 = vpop.permute.xlu0 %1324
        %1327 = vmatprep.subr.bf16.mxu0 0
        %1328 = vmatpush1.bf16.xpose.msra.mxu0 %v1288
        %1329 = vmatprep.subr.bf16.mxu0 0
        %1330 = vmatpush1.bf16.xpose.msra.mxu0 %v1289
        %1331 = vmatprep.subr.bf16.mxu0 0
        %1332 = vmatpush1.bf16.xpose.msra.mxu0 %v1290
        %1333 = vmatprep.subr.bf16.mxu0 0
        %1334 = vmatpush1.bf16.xpose.msra.mxu0 %v1291
        %1335 = vmatprep.subr.bf16.mxu0 0
        %1336 = vmatpush1.bf16.xpose.msra.mxu0 %v1292
        %1337 = vmatprep.subr.bf16.mxu0 0
        %1338 = vmatpush1.bf16.xpose.msra.mxu0 %v1293
        %1339 = vmatprep.subr.bf16.mxu0 0
        %1340 = vmatpush1.bf16.xpose.msra.mxu0 %v1294
        %1341 = vmatprep.subr.bf16.mxu0 0
        %1342 = vmatpush1.bf16.xpose.msra.mxu0 %v1295
        %1343 = vmatprep.subr.bf16.mxu0 0
        %1344 = vmatpush1.bf16.xpose.msra.mxu0 %v1296
        %1345 = vmatprep.subr.bf16.mxu0 0
        %1346 = vmatpush1.bf16.xpose.msra.mxu0 %v1297
        %1347 = vmatprep.subr.bf16.mxu0 0
        %1348 = vmatpush1.bf16.xpose.msra.mxu0 %v1298
        %1349 = vmatprep.subr.bf16.mxu0 0
        %1350 = vmatpush1.bf16.xpose.msra.mxu0 %v1299
        %1351 = vmatprep.subr.bf16.mxu0 0
        %1352 = vmatpush1.bf16.xpose.msra.mxu0 %v1300
        %1353 = vmatprep.subr.bf16.mxu0 0
        %1354 = vmatpush1.bf16.xpose.msra.mxu0 %v1301
        %1355 = vmatprep.subr.bf16.mxu0 0
        %1356 = vmatpush1.bf16.xpose.msra.mxu0 %v1302
        %1357 = vmatprep.subr.bf16.mxu0 0
        %1358 = vmatpush1.bf16.xpose.msra.mxu0 %v1303
        %1359 = vmatprep.mubr.bf16.mxu0 0
        %1360 = vmatmul.mubr.bf16.gmra.mrb[0].mxu0 %v1320
        %v1361 = vpop.f32.mrb[0].mxu0
        %v1362 = vadd.f32 %v1325, %v1361
        %v1363 = vpop.f32.mrb[0].mxu0
        %v1364 = vadd.f32 %v1325, %v1363
        %v1365 = vpop.f32.mrb[0].mxu0
        %v1366 = vpop.f32.mrb[0].mxu0
        %1367 = vdwg.mxu0
        %1368 = vmatprep.subr.bf16.mxu0 0
        %1369 = vmatpush1.bf16.xpose.msra.mxu0 %v1304
        %1370 = vmatprep.subr.bf16.mxu0 0
        %1371 = vmatpush1.bf16.xpose.msra.mxu0 %v1305
        %1372 = vmatprep.subr.bf16.mxu0 0
        %1373 = vmatpush1.bf16.xpose.msra.mxu0 %v1306
        %1374 = vmatprep.subr.bf16.mxu0 0
        %1375 = vmatpush1.bf16.xpose.msra.mxu0 %v1307
        %1376 = vmatprep.subr.bf16.mxu0 0
        %1377 = vmatpush1.bf16.xpose.msra.mxu0 %v1308
        %1378 = vmatprep.subr.bf16.mxu0 0
        %1379 = vmatpush1.bf16.xpose.msra.mxu0 %v1309
        %1380 = vmatprep.subr.bf16.mxu0 0
        %1381 = vmatpush1.bf16.xpose.msra.mxu0 %v1310
        %1382 = vmatprep.subr.bf16.mxu0 0
        %1383 = vmatpush1.bf16.xpose.msra.mxu0 %v1311
        %1384 = vmatprep.subr.bf16.mxu0 0
        %1385 = vmatpush1.bf16.xpose.msra.mxu0 %v1312
        %1386 = vmatprep.subr.bf16.mxu0 0
        %1387 = vmatpush1.bf16.xpose.msra.mxu0 %v1313
        %1388 = vmatprep.subr.bf16.mxu0 0
        %1389 = vmatpush1.bf16.xpose.msra.mxu0 %v1314
        %1390 = vmatprep.subr.bf16.mxu0 0
        %1391 = vmatpush1.bf16.xpose.msra.mxu0 %v1315
        %1392 = vmatprep.subr.bf16.mxu0 0
        %1393 = vmatpush1.bf16.xpose.msra.mxu0 %v1316
        %1394 = vmatprep.subr.bf16.mxu0 0
        %1395 = vmatpush1.bf16.xpose.msra.mxu0 %v1317
        %1396 = vmatprep.subr.bf16.mxu0 0
        %1397 = vmatpush1.bf16.xpose.msra.mxu0 %v1318
        %1398 = vmatprep.subr.bf16.mxu0 0
        %1399 = vmatpush1.bf16.xpose.msra.mxu0 %v1319
        %1400 = vmatprep.mubr.bf16.mxu0 0
        %1401 = vmatmul.mubr.bf16.gmra.mrb[0].mxu0 %v1320
        %v1402 = vpop.f32.mrb[0].mxu0
        %v1403 = vadd.f32 %v1325, %v1402
        %v1404 = vpop.f32.mrb[0].mxu0
        %v1405 = vadd.f32 %v1325, %v1404
        %v1406 = vpop.f32.mrb[0].mxu0
        %v1407 = vpop.f32.mrb[0].mxu0
        %1408 = vdwg.mxu0
        %1409 = vst [vmem:[%s309] sm:$0xff] %v1362
        %1410 = vst [vmem:[%s309 + $0x8] sm:$0xff] %v1364
        %1411 = vst [vmem:[%s309 + $0x10] sm:$0xff] %v1403
        %1412 = vst [vmem:[%s309 + $0x18] sm:$0xff] %v1405
        %s1413 = smul.u32 4, %s21
        %p1414 = scmp.lt.s32.totalorder %s1413, 7
        %s1415 = scalar_select %p1414, %s1413, 7
        %s1416 = smul.addr %s1415, 8
        %s1417 = scalar_lea.vmem %s7, %s1416
        // Predicated region
        $region53: #{decoder_forward.1} parent=47 // pred_check
          %p1418 = pneg %p191
        $region54: #{decoder_forward.1} parent=47 // pred_check_branch
          %1420 = sbr.rel (%p1418) target = $region56
        $region55: #{decoder_forward.1} parent=47 // pred_region
          %s1421 = smul.u32 4, %s21
        $region56: #{decoder_forward.1} parent=47 // pred_fallthru
          _
      $region48: #{decoder_forward.1} parent=5 // pred_fallthru
        _
      %p1422 = scmp.le.s32.totalorder 2, %s16
      // Predicated region
      $region57: #{decoder_forward.1} parent=5 // pred_check
        %p1423 = pneg %p1422
      $region58: #{decoder_forward.1} parent=5 // pred_check_branch
        %1425 = sbr.rel (%p1423) target = $region60
      $region59: #{decoder_forward.1} parent=5 // pred_region
        %s1426 = ssub.s32 %s16, 2
        // Predicated region
        $region61: #{decoder_forward.1} parent=59 // pred_check
          %p1427 = pneg %p197
        $region62: #{decoder_forward.1} parent=59 // pred_check_branch
          %1429 = sbr.rel (%p1427) target = $region64
        $region63: #{decoder_forward.1} parent=59 // pred_region
          %s1430 = smul.u32 4, %s22
          %p1431 = scmp.lt.s32.totalorder %s1430, 7
          %s1432 = scalar_select %p1431, %s1430, 7
          %s1433 = smul.addr %s1432, 8
          %s1434 = scalar_lea.vmem %s7, %s1433
        $region64: #{decoder_forward.1} parent=59 // pred_fallthru
          _
      $region60: #{decoder_forward.1} parent=5 // pred_fallthru
        _
    $region6: #{decoder_forward.1} parent=1 // loop_footer
      %s20 = sadd.s32 1, %s16
    $region7: #{decoder_forward.1} parent=1 // loop_footer_branch
      %15 = sbr.rel target = $region3
    $region8: #{decoder_forward.1} parent=1 // loop_exit
      _
    %1435 = vsyncpa [#allocation3], 1
    %s1436 = scalar_lea.sflag [#allocation3], 1
    %1437 = vsyncpa %s1436, 1

</llo_original>
